<compile_context>
chip_gen: v7x
topology: tpu7x:2x2x1
jax: 0.10.0
libtpu: 0.0.40
codegen_flags: <defaults>
</compile_context>

<pallas_src>
import jax
import jax.numpy as jnp
from jax.experimental import pallas as pl
from jax.experimental.pallas import tpu as pltpu


LEAKY_SLOPE = 0.01   # torch.nn.LeakyReLU default
BN_EPS = 1e-5        # torch.nn.BatchNorm1d default


def _leaky_relu(v):
    return jnp.where(v > 0, v, LEAKY_SLOPE * v)


# ----------------------------------------------------------------------------
# Pallas kernel: the entire (BN-folded) MLP for one batch tile.
# ----------------------------------------------------------------------------
def _mlp_kernel(x_ref,
                w1, b1, w2, b2, w3, b3, w4, b4, w5, b5, w6, b6,
                o_ref):
    def layer(h_bf16, w_ref, b_ref):
        # bf16 x bf16 -> f32 MXU accumulation; bias-add + LeakyReLU in f32
        # (VPU-friendly on v5e), then cast back to bf16 for the next matmul.
        z = jnp.dot(h_bf16, w_ref[...],
                    preferred_element_type=jnp.float32) + b_ref[...]
        return _leaky_relu(z).astype(jnp.bfloat16)

    h = x_ref[...]                                     # bf16 (tb, 512)
    h = layer(h, w1, b1)
    h = layer(h, w2, b2)
    h = layer(h, w3, b3)
    h = layer(h, w4, b4)
    h = layer(h, w5, b5)
    z = jnp.dot(h, w6[...], preferred_element_type=jnp.float32) + b6[...]
    o_ref[...] = z.astype(o_ref.dtype)


# ----------------------------------------------------------------------------
# Parameter construction (plain JAX glue, deterministic).
# Weights stored as (in, out) so the kernel computes x @ W + b.
# ----------------------------------------------------------------------------
def init_params(key, latent_dim=48, expanded_dim=128):
    dims = [512, 256, 128, 64, latent_dim, 64, expanded_dim]
    params = []
    for li, (din, dout) in enumerate(zip(dims[:-1], dims[1:])):
        key, kw, kb, kg, kbeta, km, kv = jax.random.split(key, 7)
        w = jax.random.normal(kw, (din, dout), jnp.float32) / jnp.sqrt(din)
        b = 0.05 * jax.random.normal(kb, (dout,), jnp.float32)
        if li < 5:  # all layers except the final expander Linear carry BN+LeakyReLU
            gamma = 1.0 + 0.2 * jax.random.normal(kg, (dout,), jnp.float32)
            beta = 0.1 * jax.random.normal(kbeta, (dout,), jnp.float32)
            mean = 0.1 * jax.random.normal(km, (dout,), jnp.float32)
            var = 0.8 + 0.4 * jax.random.uniform(kv, (dout,), jnp.float32)
            bn = (gamma, beta, mean, var)
        else:
            bn = None
        params.append((w, b, bn))
    return params


def fold_bn(params):
    """Fold eval-mode BatchNorm into the preceding Linear: y = x @ W' + b'."""
    fused = []
    for (w, b, bn) in params:
        if bn is None:
            fused.append((w, b.reshape(1, -1)))
        else:
            gamma, beta, mean, var = bn
            s = gamma / jnp.sqrt(var + BN_EPS)
            fused.append((w * s[None, :], ((b - mean) * s + beta).reshape(1, -1)))
    return fused


def _round_up(n, m):
    return ((n + m - 1) // m) * m


def fold_and_pack(params, pad_to=64):
    """Fold BN, zero-pad hidden dims (48 -> 64) exactly, cast weights to bf16.

    Padded output channels get zero weight columns + zero bias, so their
    post-LeakyReLU activation is exactly 0; the next layer's padded input rows
    are also zero, so the result is bit-identical math-wise.
    """
    fused = fold_bn(params)
    n_layers = len(fused)
    packed = []
    for li, (w, b) in enumerate(fused):
        din, dout = w.shape
        din_p = _round_up(din, pad_to) if li > 0 else din            # keep 512 input
        dout_p = _round_up(dout, pad_to) if li < n_layers - 1 else dout  # keep 128 output
        w = jnp.pad(w, ((0, din_p - din), (0, dout_p - dout)))
        b = jnp.pad(b, ((0, 0), (0, dout_p - dout)))
        packed.append((w.astype(jnp.bfloat16), b.astype(jnp.float32)))
    return packed


# ----------------------------------------------------------------------------
# Wrapper
# ----------------------------------------------------------------------------
def simple_dense_forward(x, params, *, block_batch=2048):
    """x: (N, 512) float -> (N, expanded_dim) float32."""
    n, din = x.shape
    fused = fold_and_pack(params)
    dout = fused[-1][0].shape[1]

    # Batch-tile size: multiple of 16 (bf16 sublane packing), capped by
    # block_batch, and chosen so the grid has an even number (>= 2) of steps
    # so v7x can shard the "parallel" batch axis across both TensorCores.
    sub = 16
    tb_cap = _round_up(block_batch, sub)
    half = _round_up(max((n + 1) // 2, 1), sub)
    tb = min(tb_cap, half)
    n_pad = _round_up(n, 2 * tb)          # even grid length

    x = x.astype(jnp.bfloat16)            # halves the dominant HBM read
    if n_pad != n:
        x = jnp.pad(x, ((0, n_pad - n), (0, 0)))

    in_specs = [pl.BlockSpec((tb, din), lambda i: (i, 0))]
    flat_params = []
    for (w, b) in fused:
        # Constant index_map -> weights/bias DMA'd once, resident in VMEM
        # across all grid steps (full-array blocks).
        in_specs.append(pl.BlockSpec(w.shape, lambda i: (0, 0)))
        in_specs.append(pl.BlockSpec(b.shape, lambda i: (0, 0)))
        flat_params.extend([w, b])

    out = pl.pallas_call(
        _mlp_kernel,
        out_shape=jax.ShapeDtypeStruct((n_pad, dout), jnp.float32),
        grid=(n_pad // tb,),
        in_specs=in_specs,
        out_specs=pl.BlockSpec((tb, dout), lambda i: (i, 0)),
        compiler_params=pltpu.CompilerParams(
            dimension_semantics=("parallel",),
            # Above v5e's 16 MiB default scoped limit; comfortably under
            # v7x's 64 MiB physical VMEM.
            vmem_limit_bytes=40 * 1024 * 1024,
        ),
    )(x, *flat_params)
    return out[:n]


# ----------------------------------------------------------------------------
# Pure-JAX reference (f32, unfolded BN, eval mode) for correctness checking.
# ----------------------------------------------------------------------------
def reference_forward(x, params):
    h = x
    for (w, b, bn) in params:
        h = jnp.dot(h, w, precision=jax.lax.Precision.HIGHEST) + b
        if bn is not None:
            gamma, beta, mean, var = bn
            h = (h - mean) / jnp.sqrt(var + BN_EPS) * gamma + beta
            h = jnp.where(h > 0, h, LEAKY_SLOPE * h)
    return h


# ----------------------------------------------------------------------------
# Demo / correctness check
# ----------------------------------------------------------------------------
if __name__ == "__main__":
    key = jax.random.PRNGKey(0)
    kx, kp = jax.random.split(key)

    batch = 32
    x = jax.random.normal(kx, (batch, 512), dtype=jnp.float32)
    params = init_params(kp, latent_dim=48, expanded_dim=128)

    out = simple_dense_forward(x, params, block_batch=2048)
    out = jax.block_until_ready(out)

    ref = reference_forward(x, params)
    assert out.shape == (batch, 128), out.shape
    # bf16 operands through 6 layers vs an f32/HIGHEST reference: allow a few
    # percent; the kernel accumulates every matmul in f32.
    err = float(jnp.max(jnp.abs(out - ref)))
    assert jnp.allclose(out, ref, atol=5e-2, rtol=5e-2), err

    print("KERNEL_OK")
</pallas_src>

<mosaic_0001>
module attributes {stable_mosaic.version = 11 : i64} {
  func.func @_mlp_kernel(%arg0: i32, %arg1: memref<16x512xbf16, #tpu.memory_space<vmem>>, %arg2: memref<512x256xbf16, #tpu.memory_space<vmem>>, %arg3: memref<1x256xf32, #tpu.memory_space<vmem>>, %arg4: memref<256x128xbf16, #tpu.memory_space<vmem>>, %arg5: memref<1x128xf32, #tpu.memory_space<vmem>>, %arg6: memref<128x64xbf16, #tpu.memory_space<vmem>>, %arg7: memref<1x64xf32, #tpu.memory_space<vmem>>, %arg8: memref<64x64xbf16, #tpu.memory_space<vmem>>, %arg9: memref<1x64xf32, #tpu.memory_space<vmem>>, %arg10: memref<64x64xbf16, #tpu.memory_space<vmem>>, %arg11: memref<1x64xf32, #tpu.memory_space<vmem>>, %arg12: memref<64x128xbf16, #tpu.memory_space<vmem>>, %arg13: memref<1x128xf32, #tpu.memory_space<vmem>>, %arg14: memref<16x128xf32, #tpu.memory_space<vmem>>) attributes {dimension_semantics = [#tpu.dimension_semantics<parallel>], iteration_bounds = array<i64: 2>, scalar_prefetch = 0 : i64, scratch_operands = 0 : i64, tpu.core_type = #tpu.core_type<tc>, window_params = [{transform_indices = @transform_0, window_bounds = array<i64: 16, 512>}, {pipeline_mode = #tpu.pipeline_mode<synchronous>, transform_indices = @transform_1, window_bounds = array<i64: 512, 256>}, {pipeline_mode = #tpu.pipeline_mode<synchronous>, transform_indices = @transform_2, window_bounds = array<i64: 1, 256>}, {pipeline_mode = #tpu.pipeline_mode<synchronous>, transform_indices = @transform_3, window_bounds = array<i64: 256, 128>}, {pipeline_mode = #tpu.pipeline_mode<synchronous>, transform_indices = @transform_4, window_bounds = array<i64: 1, 128>}, {pipeline_mode = #tpu.pipeline_mode<synchronous>, transform_indices = @transform_5, window_bounds = array<i64: 128, 64>}, {pipeline_mode = #tpu.pipeline_mode<synchronous>, transform_indices = @transform_6, window_bounds = array<i64: 1, 64>}, {pipeline_mode = #tpu.pipeline_mode<synchronous>, transform_indices = @transform_7, window_bounds = array<i64: 64, 64>}, {pipeline_mode = #tpu.pipeline_mode<synchronous>, transform_indices = @transform_8, window_bounds = array<i64: 1, 64>}, {pipeline_mode = #tpu.pipeline_mode<synchronous>, transform_indices = @transform_9, window_bounds = array<i64: 64, 64>}, {pipeline_mode = #tpu.pipeline_mode<synchronous>, transform_indices = @transform_10, window_bounds = array<i64: 1, 64>}, {pipeline_mode = #tpu.pipeline_mode<synchronous>, transform_indices = @transform_11, window_bounds = array<i64: 64, 128>}, {pipeline_mode = #tpu.pipeline_mode<synchronous>, transform_indices = @transform_12, window_bounds = array<i64: 1, 128>}, {transform_indices = @transform_13, window_bounds = array<i64: 16, 128>}]} {
    %c0 = arith.constant 0 : index
    %c0_0 = arith.constant 0 : index
    %0 = vector.load %arg1[%c0, %c0_0] : memref<16x512xbf16, #tpu.memory_space<vmem>>, vector<16x512xbf16>
    %c0_1 = arith.constant 0 : index
    %c0_2 = arith.constant 0 : index
    %1 = vector.load %arg2[%c0_1, %c0_2] : memref<512x256xbf16, #tpu.memory_space<vmem>>, vector<512x256xbf16>
    %cst = arith.constant dense<0.000000e+00> : vector<16x256xf32>
    %2 = tpu.matmul %0, %1, %cst {dimension_numbers = #tpu.dot_dimension_numbers<[1], [0], [0], [1], [0, 0, 1, 1], [], []>} : vector<16x512xbf16>, vector<512x256xbf16>, vector<16x256xf32> -> vector<16x256xf32>
    %c0_3 = arith.constant 0 : index
    %c0_4 = arith.constant 0 : index
    %3 = vector.load %arg3[%c0_3, %c0_4] : memref<1x256xf32, #tpu.memory_space<vmem>>, vector<1x256xf32>
    %4 = vector.broadcast %3 : vector<1x256xf32> to vector<16x256xf32>
    %5 = arith.addf %2, %4 : vector<16x256xf32>
    %cst_5 = arith.constant 0.000000e+00 : f32
    %6 = vector.broadcast %cst_5 : f32 to vector<16x256xf32>
    %7 = arith.cmpf ogt, %5, %6 : vector<16x256xf32>
    %cst_6 = arith.constant 0.00999999977 : f32
    %8 = vector.broadcast %cst_6 : f32 to vector<16x256xf32>
    %9 = arith.mulf %8, %5 : vector<16x256xf32>
    %10 = arith.select %7, %5, %9 : vector<16x256xi1>, vector<16x256xf32>
    %11 = arith.truncf %10 : vector<16x256xf32> to vector<16x256xbf16>
    %c0_7 = arith.constant 0 : index
    %c0_8 = arith.constant 0 : index
    %12 = vector.load %arg4[%c0_7, %c0_8] : memref<256x128xbf16, #tpu.memory_space<vmem>>, vector<256x128xbf16>
    %cst_9 = arith.constant dense<0.000000e+00> : vector<16x128xf32>
    %13 = tpu.matmul %11, %12, %cst_9 {dimension_numbers = #tpu.dot_dimension_numbers<[1], [0], [0], [1], [0, 0, 1, 1], [], []>} : vector<16x256xbf16>, vector<256x128xbf16>, vector<16x128xf32> -> vector<16x128xf32>
    %c0_10 = arith.constant 0 : index
    %c0_11 = arith.constant 0 : index
    %14 = vector.load %arg5[%c0_10, %c0_11] : memref<1x128xf32, #tpu.memory_space<vmem>>, vector<1x128xf32>
    %15 = vector.broadcast %14 : vector<1x128xf32> to vector<16x128xf32>
    %16 = arith.addf %13, %15 : vector<16x128xf32>
    %cst_12 = arith.constant 0.000000e+00 : f32
    %17 = vector.broadcast %cst_12 : f32 to vector<16x128xf32>
    %18 = arith.cmpf ogt, %16, %17 : vector<16x128xf32>
    %cst_13 = arith.constant 0.00999999977 : f32
    %19 = vector.broadcast %cst_13 : f32 to vector<16x128xf32>
    %20 = arith.mulf %19, %16 : vector<16x128xf32>
    %21 = arith.select %18, %16, %20 : vector<16x128xi1>, vector<16x128xf32>
    %22 = arith.truncf %21 : vector<16x128xf32> to vector<16x128xbf16>
    %c0_14 = arith.constant 0 : index
    %c0_15 = arith.constant 0 : index
    %23 = vector.load %arg6[%c0_14, %c0_15] : memref<128x64xbf16, #tpu.memory_space<vmem>>, vector<128x64xbf16>
    %cst_16 = arith.constant dense<0.000000e+00> : vector<16x64xf32>
    %24 = tpu.matmul %22, %23, %cst_16 {dimension_numbers = #tpu.dot_dimension_numbers<[1], [0], [0], [1], [0, 0, 1, 1], [], []>} : vector<16x128xbf16>, vector<128x64xbf16>, vector<16x64xf32> -> vector<16x64xf32>
    %c0_17 = arith.constant 0 : index
    %c0_18 = arith.constant 0 : index
    %25 = vector.load %arg7[%c0_17, %c0_18] : memref<1x64xf32, #tpu.memory_space<vmem>>, vector<1x64xf32>
    %26 = vector.broadcast %25 : vector<1x64xf32> to vector<16x64xf32>
    %27 = arith.addf %24, %26 : vector<16x64xf32>
    %cst_19 = arith.constant 0.000000e+00 : f32
    %28 = vector.broadcast %cst_19 : f32 to vector<16x64xf32>
    %29 = arith.cmpf ogt, %27, %28 : vector<16x64xf32>
    %cst_20 = arith.constant 0.00999999977 : f32
    %30 = vector.broadcast %cst_20 : f32 to vector<16x64xf32>
    %31 = arith.mulf %30, %27 : vector<16x64xf32>
    %32 = arith.select %29, %27, %31 : vector<16x64xi1>, vector<16x64xf32>
    %33 = arith.truncf %32 : vector<16x64xf32> to vector<16x64xbf16>
    %c0_21 = arith.constant 0 : index
    %c0_22 = arith.constant 0 : index
    %34 = vector.load %arg8[%c0_21, %c0_22] : memref<64x64xbf16, #tpu.memory_space<vmem>>, vector<64x64xbf16>
    %cst_23 = arith.constant dense<0.000000e+00> : vector<16x64xf32>
    %35 = tpu.matmul %33, %34, %cst_23 {dimension_numbers = #tpu.dot_dimension_numbers<[1], [0], [0], [1], [0, 0, 1, 1], [], []>} : vector<16x64xbf16>, vector<64x64xbf16>, vector<16x64xf32> -> vector<16x64xf32>
    %c0_24 = arith.constant 0 : index
    %c0_25 = arith.constant 0 : index
    %36 = vector.load %arg9[%c0_24, %c0_25] : memref<1x64xf32, #tpu.memory_space<vmem>>, vector<1x64xf32>
    %37 = vector.broadcast %36 : vector<1x64xf32> to vector<16x64xf32>
    %38 = arith.addf %35, %37 : vector<16x64xf32>
    %cst_26 = arith.constant 0.000000e+00 : f32
    %39 = vector.broadcast %cst_26 : f32 to vector<16x64xf32>
    %40 = arith.cmpf ogt, %38, %39 : vector<16x64xf32>
    %cst_27 = arith.constant 0.00999999977 : f32
    %41 = vector.broadcast %cst_27 : f32 to vector<16x64xf32>
    %42 = arith.mulf %41, %38 : vector<16x64xf32>
    %43 = arith.select %40, %38, %42 : vector<16x64xi1>, vector<16x64xf32>
    %44 = arith.truncf %43 : vector<16x64xf32> to vector<16x64xbf16>
    %c0_28 = arith.constant 0 : index
    %c0_29 = arith.constant 0 : index
    %45 = vector.load %arg10[%c0_28, %c0_29] : memref<64x64xbf16, #tpu.memory_space<vmem>>, vector<64x64xbf16>
    %cst_30 = arith.constant dense<0.000000e+00> : vector<16x64xf32>
    %46 = tpu.matmul %44, %45, %cst_30 {dimension_numbers = #tpu.dot_dimension_numbers<[1], [0], [0], [1], [0, 0, 1, 1], [], []>} : vector<16x64xbf16>, vector<64x64xbf16>, vector<16x64xf32> -> vector<16x64xf32>
    %c0_31 = arith.constant 0 : index
    %c0_32 = arith.constant 0 : index
    %47 = vector.load %arg11[%c0_31, %c0_32] : memref<1x64xf32, #tpu.memory_space<vmem>>, vector<1x64xf32>
    %48 = vector.broadcast %47 : vector<1x64xf32> to vector<16x64xf32>
    %49 = arith.addf %46, %48 : vector<16x64xf32>
    %cst_33 = arith.constant 0.000000e+00 : f32
    %50 = vector.broadcast %cst_33 : f32 to vector<16x64xf32>
    %51 = arith.cmpf ogt, %49, %50 : vector<16x64xf32>
    %cst_34 = arith.constant 0.00999999977 : f32
    %52 = vector.broadcast %cst_34 : f32 to vector<16x64xf32>
    %53 = arith.mulf %52, %49 : vector<16x64xf32>
    %54 = arith.select %51, %49, %53 : vector<16x64xi1>, vector<16x64xf32>
    %55 = arith.truncf %54 : vector<16x64xf32> to vector<16x64xbf16>
    %c0_35 = arith.constant 0 : index
    %c0_36 = arith.constant 0 : index
    %56 = vector.load %arg12[%c0_35, %c0_36] : memref<64x128xbf16, #tpu.memory_space<vmem>>, vector<64x128xbf16>
    %cst_37 = arith.constant dense<0.000000e+00> : vector<16x128xf32>
    %57 = tpu.matmul %55, %56, %cst_37 {dimension_numbers = #tpu.dot_dimension_numbers<[1], [0], [0], [1], [0, 0, 1, 1], [], []>} : vector<16x64xbf16>, vector<64x128xbf16>, vector<16x128xf32> -> vector<16x128xf32>
    %c0_38 = arith.constant 0 : index
    %c0_39 = arith.constant 0 : index
    %58 = vector.load %arg13[%c0_38, %c0_39] : memref<1x128xf32, #tpu.memory_space<vmem>>, vector<1x128xf32>
    %59 = vector.broadcast %58 : vector<1x128xf32> to vector<16x128xf32>
    %60 = arith.addf %57, %59 : vector<16x128xf32>
    %c0_40 = arith.constant 0 : index
    %c0_41 = arith.constant 0 : index
    %61 = vector.load %arg14[%c0_40, %c0_41] : memref<16x128xf32, #tpu.memory_space<vmem>>, vector<16x128xf32>
    tpu.vector_store %arg14[%c0_40, %c0_41], %60 {strides = array<i32>} : memref<16x128xf32, #tpu.memory_space<vmem>>, vector<16x128xf32>,
    return
  }
  func.func @transform_0(%arg0: i32) -> (i32, i32) {
    %c0_i32 = arith.constant 0 : i32
    %c0_i32_0 = arith.constant 0 : i32
    return %arg0, %c0_i32 : i32, i32
  }
  func.func @transform_1(%arg0: i32) -> (i32, i32) {
    %c0_i32 = arith.constant 0 : i32
    %c0_i32_0 = arith.constant 0 : i32
    %c0_i32_1 = arith.constant 0 : i32
    return %c0_i32, %c0_i32_0 : i32, i32
  }
  func.func @transform_2(%arg0: i32) -> (i32, i32) {
    %c0_i32 = arith.constant 0 : i32
    %c0_i32_0 = arith.constant 0 : i32
    %c0_i32_1 = arith.constant 0 : i32
    return %c0_i32, %c0_i32_0 : i32, i32
  }
  func.func @transform_3(%arg0: i32) -> (i32, i32) {
    %c0_i32 = arith.constant 0 : i32
    %c0_i32_0 = arith.constant 0 : i32
    %c0_i32_1 = arith.constant 0 : i32
    return %c0_i32, %c0_i32_0 : i32, i32
  }
  func.func @transform_4(%arg0: i32) -> (i32, i32) {
    %c0_i32 = arith.constant 0 : i32
    %c0_i32_0 = arith.constant 0 : i32
    %c0_i32_1 = arith.constant 0 : i32
    return %c0_i32, %c0_i32_0 : i32, i32
  }
  func.func @transform_5(%arg0: i32) -> (i32, i32) {
    %c0_i32 = arith.constant 0 : i32
    %c0_i32_0 = arith.constant 0 : i32
    %c0_i32_1 = arith.constant 0 : i32
    return %c0_i32, %c0_i32_0 : i32, i32
  }
  func.func @transform_6(%arg0: i32) -> (i32, i32) {
    %c0_i32 = arith.constant 0 : i32
    %c0_i32_0 = arith.constant 0 : i32
    %c0_i32_1 = arith.constant 0 : i32
    return %c0_i32, %c0_i32_0 : i32, i32
  }
  func.func @transform_7(%arg0: i32) -> (i32, i32) {
    %c0_i32 = arith.constant 0 : i32
    %c0_i32_0 = arith.constant 0 : i32
    %c0_i32_1 = arith.constant 0 : i32
    return %c0_i32, %c0_i32_0 : i32, i32
  }
  func.func @transform_8(%arg0: i32) -> (i32, i32) {
    %c0_i32 = arith.constant 0 : i32
    %c0_i32_0 = arith.constant 0 : i32
    %c0_i32_1 = arith.constant 0 : i32
    return %c0_i32, %c0_i32_0 : i32, i32
  }
  func.func @transform_9(%arg0: i32) -> (i32, i32) {
    %c0_i32 = arith.constant 0 : i32
    %c0_i32_0 = arith.constant 0 : i32
    %c0_i32_1 = arith.constant 0 : i32
    return %c0_i32, %c0_i32_0 : i32, i32
  }
  func.func @transform_10(%arg0: i32) -> (i32, i32) {
    %c0_i32 = arith.constant 0 : i32
    %c0_i32_0 = arith.constant 0 : i32
    %c0_i32_1 = arith.constant 0 : i32
    return %c0_i32, %c0_i32_0 : i32, i32
  }
  func.func @transform_11(%arg0: i32) -> (i32, i32) {
    %c0_i32 = arith.constant 0 : i32
    %c0_i32_0 = arith.constant 0 : i32
    %c0_i32_1 = arith.constant 0 : i32
    return %c0_i32, %c0_i32_0 : i32, i32
  }
  func.func @transform_12(%arg0: i32) -> (i32, i32) {
    %c0_i32 = arith.constant 0 : i32
    %c0_i32_0 = arith.constant 0 : i32
    %c0_i32_1 = arith.constant 0 : i32
    return %c0_i32, %c0_i32_0 : i32, i32
  }
  func.func @transform_13(%arg0: i32) -> (i32, i32) {
    %c0_i32 = arith.constant 0 : i32
    %c0_i32_0 = arith.constant 0 : i32
    return %arg0, %c0_i32 : i32, i32
  }
}

</mosaic_0001>

<llo_original>
// kernel: tpu_custom_call.1
$region0: #{tpu_custom_call.1}
  #allocation0 [shape = 'u32[]', space=smem, size = 0x4, offset = 0x4, fixed_abs, tag = 'smem constant byte address 0x4 - core index']
  #allocation1 [shape = 'u32[144,128]{1,0:T(1,128)}', space=vmem, size = 0x12000, scoped, tag = 'internal scratch']
  %s0 = inlined_call_operand.vmem [shape: bf16[32,512], index: 0, kind: input, shape index: {}]
  %s1 = inlined_call_operand.hbm [shape: bf16[512,256], index: 1, kind: input, shape index: {}]
  %s2 = inlined_call_operand.vmem [shape: f32[1,256], index: 2, kind: input, shape index: {}]
  %s3 = inlined_call_operand.hbm [shape: bf16[256,128], index: 3, kind: input, shape index: {}]
  %s4 = inlined_call_operand.hbm [shape: f32[1,128], index: 4, kind: input, shape index: {}]
  %s5 = inlined_call_operand.vmem [shape: bf16[128,64], index: 5, kind: input, shape index: {}]
  %s6 = inlined_call_operand.hbm [shape: f32[1,64], index: 6, kind: input, shape index: {}]
  %s7 = inlined_call_operand.vmem [shape: bf16[64,64], index: 7, kind: input, shape index: {}]
  %s8 = inlined_call_operand.hbm [shape: f32[1,64], index: 8, kind: input, shape index: {}]
  %s9 = inlined_call_operand.vmem [shape: bf16[64,64], index: 9, kind: input, shape index: {}]
  %s10 = inlined_call_operand.vmem [shape: f32[1,64], index: 10, kind: input, shape index: {}]
  %s11 = inlined_call_operand.hbm [shape: bf16[64,128], index: 11, kind: input, shape index: {}]
  %s12 = inlined_call_operand.vmem [shape: f32[1,128], index: 12, kind: input, shape index: {}]
  %s13 = inlined_call_operand.hbm [shape: f32[32,128], index: 13, kind: output, shape index: {}]
  %s14 = sld [smem:[#allocation0]]
  $region109: #{tpu_custom_call.1} parent=0
    _
  %s16 = ssub.s32 1, %s14
  %s17 = scalar_select 0, %s16, %s14
  $region1: #{tpu_custom_call.1} parent=0
    #allocation2 [shape = 'u8[262144]{0}', space=vmem, size = 0x40000, scoped, tag = 'input window, operand 1, single buffered']
    #allocation3 [shape = 's32[2]{0}', space=sflag, size = 0x8, scoped, tag = 'scoped memory for tpu_custom_call.1']
    #allocation4 [shape = 's32[2]{0}', space=sflag, size = 0x8, scoped, tag = 'scoped memory for tpu_custom_call.1']
    #allocation5 [shape = 'u8[65536]{0}', space=vmem, size = 0x10000, scoped, tag = 'input window, operand 3, single buffered']
    #allocation6 [shape = 's32[1]{0}', space=sflag, size = 0x4, scoped, tag = 'scoped memory for tpu_custom_call.1']
    #allocation7 [shape = 'u8[512]{0}', space=vmem, size = 0x400, scoped, tag = 'input window, operand 4, single buffered']
    #allocation8 [shape = 'u8[512]{0}', space=vmem, size = 0x400, scoped, tag = 'input window, operand 6, single buffered']
    #allocation9 [shape = 's32[1]{0}', space=sflag, size = 0x4, scoped, tag = 'scoped memory for tpu_custom_call.1']
    #allocation10 [shape = 'u8[512]{0}', space=vmem, size = 0x400, scoped, tag = 'input window, operand 8, single buffered']
    #allocation11 [shape = 'u8[16384]{0}', space=vmem, size = 0x4000, scoped, tag = 'input window, operand 11, single buffered']
    #allocation12 [shape = 's32[1]{0}', space=sflag, size = 0x4, scoped, tag = 'scoped memory for tpu_custom_call.1']
    #allocation13 [shape = 'u8[16384]{0}', space=vmem, size = 0x4000, scoped, tag = 'output window, operand 0']
    %18 = vsyncpa [#allocation3], 0
    %19 = vsyncpa [#allocation6], 0
    %20 = vsyncpa [#allocation9], 0
    %21 = vsyncpa [#allocation12], 0
    %22 = vsyncpa [#allocation4], 0
    %s23 = scalar_lea.sflag [#allocation4], 1
    %24 = vsyncpa %s23, 0
    loop: start=0, step=1, limit=4
    $region2: #{tpu_custom_call.1} parent=1 // loop_pre_header
      _
    $region3: #{tpu_custom_call.1} parent=1 // loop_header
      %s26 = sphi 0, %s30
      %p27 = scmp.ge.s32.totalorder %s26, 4
      %s36 = sphi 0, %s38
      %s39 = sphi 0, %s36
      %s40 = sphi 0, %s39
      %s56 = sphi 0, %s40
      %s60 = sphi 0, %s60
      %s62 = sphi 0, %s60
      %s63 = sphi 0, %s62
      %s77 = sphi 0, %s63
      %s81 = sphi 0, %s81
      %s83 = sphi 0, %s81
      %s84 = sphi 0, %s83
      %s98 = sphi 0, %s84
      %s102 = sphi 0, %s102
      %s104 = sphi 0, %s102
      %s105 = sphi 0, %s104
      %s119 = sphi 0, %s105
      %s123 = sphi 0, %s123
      %s125 = sphi 0, %s123
      %s126 = sphi 0, %s125
      %s140 = sphi 0, %s126
      %s144 = sphi 0, %s144
      %s146 = sphi 0, %s144
      %s147 = sphi 0, %s146
      %s161 = sphi 0, %s147
      %s165 = sphi 0, %s165
      %s167 = sphi 0, %s165
      %s168 = sphi 0, %s167
      %s182 = sphi 0, %s168
      %s186 = sphi 0, %s186
      %s188 = sphi 0, %s186
      %s189 = sphi 0, %s188
      %s203 = sphi 0, %s189
      %s207 = sphi 0, %s207
      %s209 = sphi 0, %s207
      %s210 = sphi 0, %s209
      %s224 = sphi 0, %s210
      %s228 = sphi 0, %s228
      %s230 = sphi 0, %s228
      %s231 = sphi 0, %s230
      %s245 = sphi 0, %s231
      %s249 = sphi 0, %s249
      %s251 = sphi 0, %s249
      %s252 = sphi 0, %s251
      %s266 = sphi 0, %s252
      %s270 = sphi 0, %s270
      %s272 = sphi 0, %s270
      %s273 = sphi 0, %s272
      %s287 = sphi 0, %s273
      %s291 = sphi 0, %s291
      %s293 = sphi 0, %s291
      %s294 = sphi 0, %s293
      %s308 = sphi 0, %s294
      %s314 = sphi 0, %s316
      %s317 = sphi 0, %s314
      %s318 = sphi 0, %s317
      %s334 = sphi 0, %s318
    $region4: #{tpu_custom_call.1} parent=1 // loop_header_branch
      %29 = sbr.rel (%p27) target = $region8
    $region5: #{tpu_custom_call.1} parent=1 // loop_body
      %s31 = ssub.s32 %s26, 1
      %s32 = ssub.s32 %s26, 2
      %s33 = sadd.s32 %s26, 1
      %s34 = ssub.s32 %s26, %s33
      %p35 = scmp.eq.s32.totalorder %s34, 0
      %s37 = sadd.s32 %s36, 1
      %s38 = scalar_select %p35, %s36, %s37
      %p41 = pneg %p35
      %p42 = scmp.eq.s32.totalorder %s26, 1
      %p43 = por %p41, %p42
      %p44 = scmp.ne.s32.totalorder %s36, %s39
      %p45 = scmp.eq.s32.totalorder %s26, 0
      %p46 = por %p44, %p45
      %p47 = scmp.ne.s32.totalorder %s36, %s39
      %p48 = scmp.eq.s32.totalorder %s31, 1
      %p49 = por %p47, %p48
      %p50 = scmp.ne.s32.totalorder %s39, %s40
      %p51 = scmp.eq.s32.totalorder %s31, 0
      %p52 = por %p50, %p51
      %p53 = scmp.ne.s32.totalorder %s39, %s40
      %p54 = scmp.eq.s32.totalorder %s32, 1
      %p55 = por %p53, %p54
      %p57 = scmp.ne.s32.totalorder %s40, %s56
      %p58 = scmp.eq.s32.totalorder %s32, 0
      %p59 = por %p57, %p58
      %s61 = sadd.s32 %s60, 1
      %p64 = scmp.eq.s32.totalorder %s26, 1
      %p65 = scmp.ne.s32.totalorder %s60, %s62
      %p66 = scmp.eq.s32.totalorder %s26, 0
      %p67 = por %p65, %p66
      %p68 = scmp.ne.s32.totalorder %s60, %s62
      %p69 = scmp.eq.s32.totalorder %s31, 1
      %p70 = por %p68, %p69
      %p71 = scmp.ne.s32.totalorder %s62, %s63
      %p72 = scmp.eq.s32.totalorder %s31, 0
      %p73 = por %p71, %p72
      %p74 = scmp.ne.s32.totalorder %s62, %s63
      %p75 = scmp.eq.s32.totalorder %s32, 1
      %p76 = por %p74, %p75
      %p78 = scmp.ne.s32.totalorder %s63, %s77
      %p79 = scmp.eq.s32.totalorder %s32, 0
      %p80 = por %p78, %p79
      %s82 = sadd.s32 %s81, 1
      %p85 = scmp.eq.s32.totalorder %s26, 1
      %p86 = scmp.ne.s32.totalorder %s81, %s83
      %p87 = scmp.eq.s32.totalorder %s26, 0
      %p88 = por %p86, %p87
      %p89 = scmp.ne.s32.totalorder %s81, %s83
      %p90 = scmp.eq.s32.totalorder %s31, 1
      %p91 = por %p89, %p90
      %p92 = scmp.ne.s32.totalorder %s83, %s84
      %p93 = scmp.eq.s32.totalorder %s31, 0
      %p94 = por %p92, %p93
      %p95 = scmp.ne.s32.totalorder %s83, %s84
      %p96 = scmp.eq.s32.totalorder %s32, 1
      %p97 = por %p95, %p96
      %p99 = scmp.ne.s32.totalorder %s84, %s98
      %p100 = scmp.eq.s32.totalorder %s32, 0
      %p101 = por %p99, %p100
      %s103 = sadd.s32 %s102, 1
      %p106 = scmp.eq.s32.totalorder %s26, 1
      %p107 = scmp.ne.s32.totalorder %s102, %s104
      %p108 = scmp.eq.s32.totalorder %s26, 0
      %p109 = por %p107, %p108
      %p110 = scmp.ne.s32.totalorder %s102, %s104
      %p111 = scmp.eq.s32.totalorder %s31, 1
      %p112 = por %p110, %p111
      %p113 = scmp.ne.s32.totalorder %s104, %s105
      %p114 = scmp.eq.s32.totalorder %s31, 0
      %p115 = por %p113, %p114
      %p116 = scmp.ne.s32.totalorder %s104, %s105
      %p117 = scmp.eq.s32.totalorder %s32, 1
      %p118 = por %p116, %p117
      %p120 = scmp.ne.s32.totalorder %s105, %s119
      %p121 = scmp.eq.s32.totalorder %s32, 0
      %p122 = por %p120, %p121
      %s124 = sadd.s32 %s123, 1
      %p127 = scmp.eq.s32.totalorder %s26, 1
      %p128 = scmp.ne.s32.totalorder %s123, %s125
      %p129 = scmp.eq.s32.totalorder %s26, 0
      %p130 = por %p128, %p129
      %p131 = scmp.ne.s32.totalorder %s123, %s125
      %p132 = scmp.eq.s32.totalorder %s31, 1
      %p133 = por %p131, %p132
      %p134 = scmp.ne.s32.totalorder %s125, %s126
      %p135 = scmp.eq.s32.totalorder %s31, 0
      %p136 = por %p134, %p135
      %p137 = scmp.ne.s32.totalorder %s125, %s126
      %p138 = scmp.eq.s32.totalorder %s32, 1
      %p139 = por %p137, %p138
      %p141 = scmp.ne.s32.totalorder %s126, %s140
      %p142 = scmp.eq.s32.totalorder %s32, 0
      %p143 = por %p141, %p142
      %s145 = sadd.s32 %s144, 1
      %p148 = scmp.eq.s32.totalorder %s26, 1
      %p149 = scmp.ne.s32.totalorder %s144, %s146
      %p150 = scmp.eq.s32.totalorder %s26, 0
      %p151 = por %p149, %p150
      %p152 = scmp.ne.s32.totalorder %s144, %s146
      %p153 = scmp.eq.s32.totalorder %s31, 1
      %p154 = por %p152, %p153
      %p155 = scmp.ne.s32.totalorder %s146, %s147
      %p156 = scmp.eq.s32.totalorder %s31, 0
      %p157 = por %p155, %p156
      %p158 = scmp.ne.s32.totalorder %s146, %s147
      %p159 = scmp.eq.s32.totalorder %s32, 1
      %p160 = por %p158, %p159
      %p162 = scmp.ne.s32.totalorder %s147, %s161
      %p163 = scmp.eq.s32.totalorder %s32, 0
      %p164 = por %p162, %p163
      %s166 = sadd.s32 %s165, 1
      %p169 = scmp.eq.s32.totalorder %s26, 1
      %p170 = scmp.ne.s32.totalorder %s165, %s167
      %p171 = scmp.eq.s32.totalorder %s26, 0
      %p172 = por %p170, %p171
      %p173 = scmp.ne.s32.totalorder %s165, %s167
      %p174 = scmp.eq.s32.totalorder %s31, 1
      %p175 = por %p173, %p174
      %p176 = scmp.ne.s32.totalorder %s167, %s168
      %p177 = scmp.eq.s32.totalorder %s31, 0
      %p178 = por %p176, %p177
      %p179 = scmp.ne.s32.totalorder %s167, %s168
      %p180 = scmp.eq.s32.totalorder %s32, 1
      %p181 = por %p179, %p180
      %p183 = scmp.ne.s32.totalorder %s168, %s182
      %p184 = scmp.eq.s32.totalorder %s32, 0
      %p185 = por %p183, %p184
      %s187 = sadd.s32 %s186, 1
      %p190 = scmp.eq.s32.totalorder %s26, 1
      %p191 = scmp.ne.s32.totalorder %s186, %s188
      %p192 = scmp.eq.s32.totalorder %s26, 0
      %p193 = por %p191, %p192
      %p194 = scmp.ne.s32.totalorder %s186, %s188
      %p195 = scmp.eq.s32.totalorder %s31, 1
      %p196 = por %p194, %p195
      %p197 = scmp.ne.s32.totalorder %s188, %s189
      %p198 = scmp.eq.s32.totalorder %s31, 0
      %p199 = por %p197, %p198
      %p200 = scmp.ne.s32.totalorder %s188, %s189
      %p201 = scmp.eq.s32.totalorder %s32, 1
      %p202 = por %p200, %p201
      %p204 = scmp.ne.s32.totalorder %s189, %s203
      %p205 = scmp.eq.s32.totalorder %s32, 0
      %p206 = por %p204, %p205
      %s208 = sadd.s32 %s207, 1
      %p211 = scmp.eq.s32.totalorder %s26, 1
      %p212 = scmp.ne.s32.totalorder %s207, %s209
      %p213 = scmp.eq.s32.totalorder %s26, 0
      %p214 = por %p212, %p213
      %p215 = scmp.ne.s32.totalorder %s207, %s209
      %p216 = scmp.eq.s32.totalorder %s31, 1
      %p217 = por %p215, %p216
      %p218 = scmp.ne.s32.totalorder %s209, %s210
      %p219 = scmp.eq.s32.totalorder %s31, 0
      %p220 = por %p218, %p219
      %p221 = scmp.ne.s32.totalorder %s209, %s210
      %p222 = scmp.eq.s32.totalorder %s32, 1
      %p223 = por %p221, %p222
      %p225 = scmp.ne.s32.totalorder %s210, %s224
      %p226 = scmp.eq.s32.totalorder %s32, 0
      %p227 = por %p225, %p226
      %s229 = sadd.s32 %s228, 1
      %p232 = scmp.eq.s32.totalorder %s26, 1
      %p233 = scmp.ne.s32.totalorder %s228, %s230
      %p234 = scmp.eq.s32.totalorder %s26, 0
      %p235 = por %p233, %p234
      %p236 = scmp.ne.s32.totalorder %s228, %s230
      %p237 = scmp.eq.s32.totalorder %s31, 1
      %p238 = por %p236, %p237
      %p239 = scmp.ne.s32.totalorder %s230, %s231
      %p240 = scmp.eq.s32.totalorder %s31, 0
      %p241 = por %p239, %p240
      %p242 = scmp.ne.s32.totalorder %s230, %s231
      %p243 = scmp.eq.s32.totalorder %s32, 1
      %p244 = por %p242, %p243
      %p246 = scmp.ne.s32.totalorder %s231, %s245
      %p247 = scmp.eq.s32.totalorder %s32, 0
      %p248 = por %p246, %p247
      %s250 = sadd.s32 %s249, 1
      %p253 = scmp.eq.s32.totalorder %s26, 1
      %p254 = scmp.ne.s32.totalorder %s249, %s251
      %p255 = scmp.eq.s32.totalorder %s26, 0
      %p256 = por %p254, %p255
      %p257 = scmp.ne.s32.totalorder %s249, %s251
      %p258 = scmp.eq.s32.totalorder %s31, 1
      %p259 = por %p257, %p258
      %p260 = scmp.ne.s32.totalorder %s251, %s252
      %p261 = scmp.eq.s32.totalorder %s31, 0
      %p262 = por %p260, %p261
      %p263 = scmp.ne.s32.totalorder %s251, %s252
      %p264 = scmp.eq.s32.totalorder %s32, 1
      %p265 = por %p263, %p264
      %p267 = scmp.ne.s32.totalorder %s252, %s266
      %p268 = scmp.eq.s32.totalorder %s32, 0
      %p269 = por %p267, %p268
      %s271 = sadd.s32 %s270, 1
      %p274 = scmp.eq.s32.totalorder %s26, 1
      %p275 = scmp.ne.s32.totalorder %s270, %s272
      %p276 = scmp.eq.s32.totalorder %s26, 0
      %p277 = por %p275, %p276
      %p278 = scmp.ne.s32.totalorder %s270, %s272
      %p279 = scmp.eq.s32.totalorder %s31, 1
      %p280 = por %p278, %p279
      %p281 = scmp.ne.s32.totalorder %s272, %s273
      %p282 = scmp.eq.s32.totalorder %s31, 0
      %p283 = por %p281, %p282
      %p284 = scmp.ne.s32.totalorder %s272, %s273
      %p285 = scmp.eq.s32.totalorder %s32, 1
      %p286 = por %p284, %p285
      %p288 = scmp.ne.s32.totalorder %s273, %s287
      %p289 = scmp.eq.s32.totalorder %s32, 0
      %p290 = por %p288, %p289
      %s292 = sadd.s32 %s291, 1
      %p295 = scmp.eq.s32.totalorder %s26, 1
      %p296 = scmp.ne.s32.totalorder %s291, %s293
      %p297 = scmp.eq.s32.totalorder %s26, 0
      %p298 = por %p296, %p297
      %p299 = scmp.ne.s32.totalorder %s291, %s293
      %p300 = scmp.eq.s32.totalorder %s31, 1
      %p301 = por %p299, %p300
      %p302 = scmp.ne.s32.totalorder %s293, %s294
      %p303 = scmp.eq.s32.totalorder %s31, 0
      %p304 = por %p302, %p303
      %p305 = scmp.ne.s32.totalorder %s293, %s294
      %p306 = scmp.eq.s32.totalorder %s32, 1
      %p307 = por %p305, %p306
      %p309 = scmp.ne.s32.totalorder %s294, %s308
      %p310 = scmp.eq.s32.totalorder %s32, 0
      %p311 = por %p309, %p310
      %s312 = ssub.s32 %s26, %s33
      %p313 = scmp.eq.s32.totalorder %s312, 0
      %s315 = sadd.s32 %s314, 1
      %s316 = scalar_select %p313, %s314, %s315
      %p319 = pneg %p313
      %p320 = scmp.eq.s32.totalorder %s26, 1
      %p321 = por %p319, %p320
      %p322 = scmp.ne.s32.totalorder %s314, %s317
      %p323 = scmp.eq.s32.totalorder %s26, 0
      %p324 = por %p322, %p323
      %p325 = scmp.ne.s32.totalorder %s314, %s317
      %p326 = scmp.eq.s32.totalorder %s31, 1
      %p327 = por %p325, %p326
      %p328 = scmp.ne.s32.totalorder %s317, %s318
      %p329 = scmp.eq.s32.totalorder %s31, 0
      %p330 = por %p328, %p329
      %p331 = scmp.ne.s32.totalorder %s317, %s318
      %p332 = scmp.eq.s32.totalorder %s32, 1
      %p333 = por %p331, %p332
      %p335 = scmp.ne.s32.totalorder %s318, %s334
      %p336 = scmp.eq.s32.totalorder %s32, 0
      %p337 = por %p335, %p336
      %p338 = scmp.le.s32.totalorder 1, %s26
      %p339 = scmp.lt.s32.totalorder %s26, 3
      %p340 = pnand %p338, %p339
      %p341 = pneg %p340
      // Predicated region
      $region9: #{tpu_custom_call.1} parent=5 // pred_check
        _
      $region10: #{tpu_custom_call.1} parent=5 // pred_check_branch
        %343 = sbr.rel (%p340) target = $region12
      $region11: #{tpu_custom_call.1} parent=5 // pred_region
        %s344 = ssub.s32 %s26, 1
        // Predicated region
        $region13: #{tpu_custom_call.1} parent=11 // pred_check
          %p345 = pneg %p73
        $region14: #{tpu_custom_call.1} parent=11 // pred_check_branch
          %347 = sbr.rel (%p345) target = $region16
        $region15: #{tpu_custom_call.1} parent=11 // pred_region
          %s349 = ssub.s32 8192, 8192
          %350 = vsyncadd [#allocation3], %s349
          %s351 = sshll.u32 [#allocation2], 4
          %s352 = int_to_ptr.vmem [resolvable:$true] %s351
          %357 = dma.hbm_to_vmem [thread:$0]  %s1, 8192, %s352, [#allocation3], 128, 128, 8
        $region16: #{tpu_custom_call.1} parent=11 // pred_fallthru
          _
        // Predicated region
        $region17: #{tpu_custom_call.1} parent=11 // pred_check
          %p358 = pneg %p94
        $region18: #{tpu_custom_call.1} parent=11 // pred_check_branch
          %360 = sbr.rel (%p358) target = $region20
        $region19: #{tpu_custom_call.1} parent=11 // pred_region
          _
        $region20: #{tpu_custom_call.1} parent=11 // pred_fallthru
          _
        // Predicated region
        $region21: #{tpu_custom_call.1} parent=11 // pred_check
          %p361 = pneg %p115
        $region22: #{tpu_custom_call.1} parent=11 // pred_check_branch
          %363 = sbr.rel (%p361) target = $region24
        $region23: #{tpu_custom_call.1} parent=11 // pred_region
          %s365 = ssub.s32 2048, 2048
          %366 = vsyncadd [#allocation6], %s365
          %s367 = sshll.u32 [#allocation5], 4
          %s368 = int_to_ptr.vmem [resolvable:$true] %s367
          %373 = dma.hbm_to_vmem [thread:$0]  %s3, 2048, %s368, [#allocation6], 64, 64, 4
        $region24: #{tpu_custom_call.1} parent=11 // pred_fallthru
          _
        // Predicated region
        $region25: #{tpu_custom_call.1} parent=11 // pred_check
          %p374 = pneg %p136
        $region26: #{tpu_custom_call.1} parent=11 // pred_check_branch
          %376 = sbr.rel (%p374) target = $region28
        $region27: #{tpu_custom_call.1} parent=11 // pred_region
          %s378 = ssub.s32 16, 16
          %379 = vsyncadd [#allocation6], %s378
          %s381 = sshll.u32 [#allocation7], 4
          %s382 = int_to_ptr.vmem [resolvable:$true] %s381
          %384 = dma.hbm_to_vmem [thread:$0]  %s4, 16, %s382, [#allocation6]
        $region28: #{tpu_custom_call.1} parent=11 // pred_fallthru
          _
        // Predicated region
        $region29: #{tpu_custom_call.1} parent=11 // pred_check
          %p385 = pneg %p157
        $region30: #{tpu_custom_call.1} parent=11 // pred_check_branch
          %387 = sbr.rel (%p385) target = $region32
        $region31: #{tpu_custom_call.1} parent=11 // pred_region
          _
        $region32: #{tpu_custom_call.1} parent=11 // pred_fallthru
          _
        // Predicated region
        $region33: #{tpu_custom_call.1} parent=11 // pred_check
          %p388 = pneg %p178
        $region34: #{tpu_custom_call.1} parent=11 // pred_check_branch
          %390 = sbr.rel (%p388) target = $region36
        $region35: #{tpu_custom_call.1} parent=11 // pred_region
          %s392 = ssub.s32 16, 16
          %393 = vsyncadd [#allocation9], %s392
          %s395 = sshll.u32 [#allocation8], 4
          %s396 = int_to_ptr.vmem [resolvable:$true] %s395
          %398 = dma.hbm_to_vmem [thread:$0]  %s6, 16, %s396, [#allocation9]
        $region36: #{tpu_custom_call.1} parent=11 // pred_fallthru
          _
        // Predicated region
        $region37: #{tpu_custom_call.1} parent=11 // pred_check
          %p399 = pneg %p199
        $region38: #{tpu_custom_call.1} parent=11 // pred_check_branch
          %401 = sbr.rel (%p399) target = $region40
        $region39: #{tpu_custom_call.1} parent=11 // pred_region
          _
        $region40: #{tpu_custom_call.1} parent=11 // pred_fallthru
          _
        // Predicated region
        $region41: #{tpu_custom_call.1} parent=11 // pred_check
          %p402 = pneg %p220
        $region42: #{tpu_custom_call.1} parent=11 // pred_check_branch
          %404 = sbr.rel (%p402) target = $region44
        $region43: #{tpu_custom_call.1} parent=11 // pred_region
          %s406 = ssub.s32 16, 16
          %407 = vsyncadd [#allocation9], %s406
          %s409 = sshll.u32 [#allocation10], 4
          %s410 = int_to_ptr.vmem [resolvable:$true] %s409
          %412 = dma.hbm_to_vmem [thread:$0]  %s8, 16, %s410, [#allocation9]
        $region44: #{tpu_custom_call.1} parent=11 // pred_fallthru
          _
        // Predicated region
        $region45: #{tpu_custom_call.1} parent=11 // pred_check
          %p413 = pneg %p241
        $region46: #{tpu_custom_call.1} parent=11 // pred_check_branch
          %415 = sbr.rel (%p413) target = $region48
        $region47: #{tpu_custom_call.1} parent=11 // pred_region
          _
        $region48: #{tpu_custom_call.1} parent=11 // pred_fallthru
          _
        // Predicated region
        $region49: #{tpu_custom_call.1} parent=11 // pred_check
          %p416 = pneg %p262
        $region50: #{tpu_custom_call.1} parent=11 // pred_check_branch
          %418 = sbr.rel (%p416) target = $region52
        $region51: #{tpu_custom_call.1} parent=11 // pred_region
          _
        $region52: #{tpu_custom_call.1} parent=11 // pred_fallthru
          _
        // Predicated region
        $region53: #{tpu_custom_call.1} parent=11 // pred_check
          %p419 = pneg %p283
        $region54: #{tpu_custom_call.1} parent=11 // pred_check_branch
          %421 = sbr.rel (%p419) target = $region56
        $region55: #{tpu_custom_call.1} parent=11 // pred_region
          %s423 = ssub.s32 512, 512
          %424 = vsyncadd [#allocation12], %s423
          %s425 = sshll.u32 [#allocation11], 4
          %s426 = int_to_ptr.vmem [resolvable:$true] %s425
          %431 = dma.hbm_to_vmem [thread:$0]  %s11, 512, %s426, [#allocation12], 64, 64, 4
        $region56: #{tpu_custom_call.1} parent=11 // pred_fallthru
          _
        // Predicated region
        $region57: #{tpu_custom_call.1} parent=11 // pred_check
          %p432 = pneg %p304
        $region58: #{tpu_custom_call.1} parent=11 // pred_check_branch
          %434 = sbr.rel (%p432) target = $region60
        $region59: #{tpu_custom_call.1} parent=11 // pred_region
          _
        $region60: #{tpu_custom_call.1} parent=11 // pred_fallthru
          _
      $region12: #{tpu_custom_call.1} parent=5 // pred_fallthru
        _
      %p435 = scmp.lt.s32.totalorder %s26, 2
      // Predicated region
      $region61: #{tpu_custom_call.1} parent=5 // pred_check
        %p436 = pneg %p435
      $region62: #{tpu_custom_call.1} parent=5 // pred_check_branch
        %438 = sbr.rel (%p436) target = $region64
      $region63: #{tpu_custom_call.1} parent=5 // pred_region
        // Predicated region
        $region65: #{tpu_custom_call.1} parent=63 // pred_check
          %p439 = pneg %p46
        $region66: #{tpu_custom_call.1} parent=63 // pred_check_branch
          %441 = sbr.rel (%p439) target = $region68
        $region67: #{tpu_custom_call.1} parent=63 // pred_region
          %s442 = smul.u32 2, %s26
          %p443 = scmp.lt.s32.totalorder %s442, 3
          %s444 = scalar_select %p443, %s442, 3
          %s445 = smul.addr %s444, 4
          %s446 = smul.addr %s445, 4
          %s447 = scalar_lea.vmem %s0, %s446
          %s448 = smul.u32 2, %s26
        $region68: #{tpu_custom_call.1} parent=63 // pred_fallthru
          _
      $region64: #{tpu_custom_call.1} parent=5 // pred_fallthru
        _
      %p449 = scmp.le.s32.totalorder 1, %s26
      %p450 = scmp.lt.s32.totalorder %s26, 3
      %p451 = pnand %p449, %p450
      %p452 = pneg %p451
      // Predicated region
      $region69: #{tpu_custom_call.1} parent=5 // pred_check
        _
      $region70: #{tpu_custom_call.1} parent=5 // pred_check_branch
        %454 = sbr.rel (%p451) target = $region72
      $region71: #{tpu_custom_call.1} parent=5 // pred_region
        %s455 = ssub.s32 %s26, 1
        // Predicated region
        $region73: #{tpu_custom_call.1} parent=71 // pred_check
          %p456 = pneg %p73
        $region74: #{tpu_custom_call.1} parent=71 // pred_check_branch
          %458 = sbr.rel (%p456) target = $region76
        $region75: #{tpu_custom_call.1} parent=71 // pred_region
          %459 = dma.done [#allocation3], 8192
        $region76: #{tpu_custom_call.1} parent=71 // pred_fallthru
          _
        // Predicated region
        $region77: #{tpu_custom_call.1} parent=71 // pred_check
          %p460 = pneg %p115
        $region78: #{tpu_custom_call.1} parent=71 // pred_check_branch
          %462 = sbr.rel (%p460) target = $region80
        $region79: #{tpu_custom_call.1} parent=71 // pred_region
          %463 = dma.done [#allocation6], 2048
        $region80: #{tpu_custom_call.1} parent=71 // pred_fallthru
          _
        // Predicated region
        $region81: #{tpu_custom_call.1} parent=71 // pred_check
          %p464 = pneg %p136
        $region82: #{tpu_custom_call.1} parent=71 // pred_check_branch
          %466 = sbr.rel (%p464) target = $region84
        $region83: #{tpu_custom_call.1} parent=71 // pred_region
          %467 = dma.done [#allocation6], 16
        $region84: #{tpu_custom_call.1} parent=71 // pred_fallthru
          _
        // Predicated region
        $region85: #{tpu_custom_call.1} parent=71 // pred_check
          %p468 = pneg %p178
        $region86: #{tpu_custom_call.1} parent=71 // pred_check_branch
          %470 = sbr.rel (%p468) target = $region88
        $region87: #{tpu_custom_call.1} parent=71 // pred_region
          %471 = dma.done [#allocation9], 16
        $region88: #{tpu_custom_call.1} parent=71 // pred_fallthru
          _
        // Predicated region
        $region89: #{tpu_custom_call.1} parent=71 // pred_check
          %p472 = pneg %p220
        $region90: #{tpu_custom_call.1} parent=71 // pred_check_branch
          %474 = sbr.rel (%p472) target = $region92
        $region91: #{tpu_custom_call.1} parent=71 // pred_region
          %475 = dma.done [#allocation9], 16
        $region92: #{tpu_custom_call.1} parent=71 // pred_fallthru
          _
        // Predicated region
        $region93: #{tpu_custom_call.1} parent=71 // pred_check
          %p476 = pneg %p283
        $region94: #{tpu_custom_call.1} parent=71 // pred_check_branch
          %478 = sbr.rel (%p476) target = $region96
        $region95: #{tpu_custom_call.1} parent=71 // pred_region
          %479 = dma.done [#allocation12], 512
        $region96: #{tpu_custom_call.1} parent=71 // pred_fallthru
          _
        %s480 = smul.u32 2, %s31
        %p481 = scmp.lt.s32.totalorder %s480, 3
        %s482 = scalar_select %p481, %s480, 3
        %s483 = smul.addr %s482, 4
        %s484 = smul.addr %s483, 4
        %s485 = scalar_lea.vmem %s0, %s484
        %p486 = pneg %p52
        %p487 = pneg %p49
        %p488 = pneg %p73
        %p489 = pneg %p70
        %p490 = pneg %p94
        %p491 = pneg %p91
        %p492 = pneg %p115
        %p493 = pneg %p112
        %p494 = pneg %p136
        %p495 = pneg %p133
        %p496 = pneg %p157
        %p497 = pneg %p154
        %p498 = pneg %p178
        %p499 = pneg %p175
        %p500 = pneg %p199
        %p501 = pneg %p196
        %p502 = pneg %p220
        %p503 = pneg %p217
        %p504 = pneg %p241
        %p505 = pneg %p238
        %p506 = pneg %p262
        %p507 = pneg %p259
        %p508 = pneg %p283
        %p509 = pneg %p280
        %p510 = pneg %p304
        %p511 = pneg %p301
        %p512 = pneg %p330
        %p513 = pneg %p327
        %s514 = sand.u32 %s317, 1
        %s515 = scalar_lea.sflag [#allocation4], %s514
        %s516 = sand.u32 %s317, 1
        %s517 = smul.addr %s516, 16
        %s518 = scalar_lea.vmem [#allocation13], %s517
        %s519 = smul.u32 2, %s31
        %p520 = scmp.lt.s32.totalorder %s519, 3
        %s521 = scalar_select %p520, %s519, 3
        %s522 = smul.addr %s521, 4
        %s523 = smul.addr %s522, 4
        %s524 = scalar_lea.vmem %s0, %s523
        %s525 = smul.u32 2, %s31
        %s526 = smul.u32 2, %s31
        %v528 = vld [vmem:[%s524] sm:$0xff]
        %v529 = vld [vmem:[%s524 + $0x8] sm:$0xff]
        %v530 = vld [vmem:[%s524 + $0x10] sm:$0xff]
        %v531 = vld [vmem:[%s524 + $0x18] sm:$0xff]
        %v532 = vld [vmem:[#allocation2] sm:$0xff]
        %v533 = vld [vmem:[#allocation2 + $0x8] sm:$0xff]
        %v534 = vld [vmem:[#allocation2 + $0x10] sm:$0xff]
        %v535 = vld [vmem:[#allocation2 + $0x18] sm:$0xff]
        %v536 = vld [vmem:[#allocation2 + $0x20] sm:$0xff]
        %v537 = vld [vmem:[#allocation2 + $0x28] sm:$0xff]
        %v538 = vld [vmem:[#allocation2 + $0x30] sm:$0xff]
        %v539 = vld [vmem:[#allocation2 + $0x38] sm:$0xff]
        %v540 = vld [vmem:[#allocation2 + $0x40] sm:$0xff]
        %v541 = vld [vmem:[#allocation2 + $0x48] sm:$0xff]
        %v542 = vld [vmem:[#allocation2 + $0x50] sm:$0xff]
        %v543 = vld [vmem:[#allocation2 + $0x58] sm:$0xff]
        %v544 = vld [vmem:[#allocation2 + $0x60] sm:$0xff]
        %v545 = vld [vmem:[#allocation2 + $0x68] sm:$0xff]
        %v546 = vld [vmem:[#allocation2 + $0x70] sm:$0xff]
        %v547 = vld [vmem:[#allocation2 + $0x78] sm:$0xff]
        %v548 = vld [vmem:[#allocation2 + $0x80] sm:$0xff]
        %v549 = vld [vmem:[#allocation2 + $0x88] sm:$0xff]
        %v550 = vld [vmem:[#allocation2 + $0x90] sm:$0xff]
        %v551 = vld [vmem:[#allocation2 + $0x98] sm:$0xff]
        %v552 = vld [vmem:[#allocation2 + $0xa0] sm:$0xff]
        %v553 = vld [vmem:[#allocation2 + $0xa8] sm:$0xff]
        %v554 = vld [vmem:[#allocation2 + $0xb0] sm:$0xff]
        %v555 = vld [vmem:[#allocation2 + $0xb8] sm:$0xff]
        %v556 = vld [vmem:[#allocation2 + $0xc0] sm:$0xff]
        %v557 = vld [vmem:[#allocation2 + $0xc8] sm:$0xff]
        %v558 = vld [vmem:[#allocation2 + $0xd0] sm:$0xff]
        %v559 = vld [vmem:[#allocation2 + $0xd8] sm:$0xff]
        %v560 = vld [vmem:[#allocation2 + $0xe0] sm:$0xff]
        %v561 = vld [vmem:[#allocation2 + $0xe8] sm:$0xff]
        %v562 = vld [vmem:[#allocation2 + $0xf0] sm:$0xff]
        %v563 = vld [vmem:[#allocation2 + $0xf8] sm:$0xff]
        %v564 = vld [vmem:[#allocation2 + $0x100] sm:$0xff]
        %v565 = vld [vmem:[#allocation2 + $0x108] sm:$0xff]
        %v566 = vld [vmem:[#allocation2 + $0x110] sm:$0xff]
        %v567 = vld [vmem:[#allocation2 + $0x118] sm:$0xff]
        %v568 = vld [vmem:[#allocation2 + $0x120] sm:$0xff]
        %v569 = vld [vmem:[#allocation2 + $0x128] sm:$0xff]
        %v570 = vld [vmem:[#allocation2 + $0x130] sm:$0xff]
        %v571 = vld [vmem:[#allocation2 + $0x138] sm:$0xff]
        %v572 = vld [vmem:[#allocation2 + $0x140] sm:$0xff]
        %v573 = vld [vmem:[#allocation2 + $0x148] sm:$0xff]
        %v574 = vld [vmem:[#allocation2 + $0x150] sm:$0xff]
        %v575 = vld [vmem:[#allocation2 + $0x158] sm:$0xff]
        %v576 = vld [vmem:[#allocation2 + $0x160] sm:$0xff]
        %v577 = vld [vmem:[#allocation2 + $0x168] sm:$0xff]
        %v578 = vld [vmem:[#allocation2 + $0x170] sm:$0xff]
        %v579 = vld [vmem:[#allocation2 + $0x178] sm:$0xff]
        %v580 = vld [vmem:[#allocation2 + $0x180] sm:$0xff]
        %v581 = vld [vmem:[#allocation2 + $0x188] sm:$0xff]
        %v582 = vld [vmem:[#allocation2 + $0x190] sm:$0xff]
        %v583 = vld [vmem:[#allocation2 + $0x198] sm:$0xff]
        %v584 = vld [vmem:[#allocation2 + $0x1a0] sm:$0xff]
        %v585 = vld [vmem:[#allocation2 + $0x1a8] sm:$0xff]
        %v586 = vld [vmem:[#allocation2 + $0x1b0] sm:$0xff]
        %v587 = vld [vmem:[#allocation2 + $0x1b8] sm:$0xff]
        %v588 = vld [vmem:[#allocation2 + $0x1c0] sm:$0xff]
        %v589 = vld [vmem:[#allocation2 + $0x1c8] sm:$0xff]
        %v590 = vld [vmem:[#allocation2 + $0x1d0] sm:$0xff]
        %v591 = vld [vmem:[#allocation2 + $0x1d8] sm:$0xff]
        %v592 = vld [vmem:[#allocation2 + $0x1e0] sm:$0xff]
        %v593 = vld [vmem:[#allocation2 + $0x1e8] sm:$0xff]
        %v594 = vld [vmem:[#allocation2 + $0x1f0] sm:$0xff]
        %v595 = vld [vmem:[#allocation2 + $0x1f8] sm:$0xff]
        %v596 = vld [vmem:[%s2] sm:$0x3]
        %v598 = vlaneseq
        %v599 = vshrl.u32 %v598, 7
        %v600 = vsub.s32 0, %v599
        %v601 = vrot.slane %v596, %v600
        %v602 = vlaneseq
        %v603 = vshrl.u32 %v602, 7
        %v604 = vsub.s32 1, %v603
        %v605 = vrot.slane %v596, %v604
        %v612 = vunpack.c.l.b16 %v528
        %v613 = vunpack.c.h.b16 %v528
        %v614 = vunpack.c.l.b16 %v529
        %v615 = vunpack.c.h.b16 %v529
        %v616 = vunpack.c.l.b16 %v530
        %v617 = vunpack.c.h.b16 %v530
        %v618 = vunpack.c.l.b16 %v531
        %v619 = vunpack.c.h.b16 %v531
        %v620 = vpack.c.b16 %v616, %v612
        %v621 = vpack.c.b16 %v617, %v613
        %v622 = vpack.c.b16 %v618, %v614
        %v623 = vpack.c.b16 %v619, %v615
        %v692 = vunpack.c.l.b16 %v532
        %v693 = vunpack.c.h.b16 %v532
        %v694 = vunpack.c.l.b16 %v533
        %v695 = vunpack.c.h.b16 %v533
        %v696 = vunpack.c.l.b16 %v534
        %v697 = vunpack.c.h.b16 %v534
        %v698 = vunpack.c.l.b16 %v535
        %v699 = vunpack.c.h.b16 %v535
        %v700 = vunpack.c.l.b16 %v536
        %v701 = vunpack.c.h.b16 %v536
        %v702 = vunpack.c.l.b16 %v537
        %v703 = vunpack.c.h.b16 %v537
        %v704 = vunpack.c.l.b16 %v538
        %v705 = vunpack.c.h.b16 %v538
        %v706 = vunpack.c.l.b16 %v539
        %v707 = vunpack.c.h.b16 %v539
        %v708 = vunpack.c.l.b16 %v540
        %v709 = vunpack.c.h.b16 %v540
        %v710 = vunpack.c.l.b16 %v541
        %v711 = vunpack.c.h.b16 %v541
        %v712 = vunpack.c.l.b16 %v542
        %v713 = vunpack.c.h.b16 %v542
        %v714 = vunpack.c.l.b16 %v543
        %v715 = vunpack.c.h.b16 %v543
        %v716 = vunpack.c.l.b16 %v544
        %v717 = vunpack.c.h.b16 %v544
        %v718 = vunpack.c.l.b16 %v545
        %v719 = vunpack.c.h.b16 %v545
        %v720 = vunpack.c.l.b16 %v546
        %v721 = vunpack.c.h.b16 %v546
        %v722 = vunpack.c.l.b16 %v547
        %v723 = vunpack.c.h.b16 %v547
        %v724 = vunpack.c.l.b16 %v548
        %v725 = vunpack.c.h.b16 %v548
        %v726 = vunpack.c.l.b16 %v549
        %v727 = vunpack.c.h.b16 %v549
        %v728 = vunpack.c.l.b16 %v550
        %v729 = vunpack.c.h.b16 %v550
        %v730 = vunpack.c.l.b16 %v551
        %v731 = vunpack.c.h.b16 %v551
        %v732 = vunpack.c.l.b16 %v552
        %v733 = vunpack.c.h.b16 %v552
        %v734 = vunpack.c.l.b16 %v553
        %v735 = vunpack.c.h.b16 %v553
        %v736 = vunpack.c.l.b16 %v554
        %v737 = vunpack.c.h.b16 %v554
        %v738 = vunpack.c.l.b16 %v555
        %v739 = vunpack.c.h.b16 %v555
        %v740 = vunpack.c.l.b16 %v556
        %v741 = vunpack.c.h.b16 %v556
        %v742 = vunpack.c.l.b16 %v557
        %v743 = vunpack.c.h.b16 %v557
        %v744 = vunpack.c.l.b16 %v558
        %v745 = vunpack.c.h.b16 %v558
        %v746 = vunpack.c.l.b16 %v559
        %v747 = vunpack.c.h.b16 %v559
        %v748 = vunpack.c.l.b16 %v560
        %v749 = vunpack.c.h.b16 %v560
        %v750 = vunpack.c.l.b16 %v561
        %v751 = vunpack.c.h.b16 %v561
        %v752 = vunpack.c.l.b16 %v562
        %v753 = vunpack.c.h.b16 %v562
        %v754 = vunpack.c.l.b16 %v563
        %v755 = vunpack.c.h.b16 %v563
        %v756 = vunpack.c.l.b16 %v564
        %v757 = vunpack.c.h.b16 %v564
        %v758 = vunpack.c.l.b16 %v565
        %v759 = vunpack.c.h.b16 %v565
        %v760 = vunpack.c.l.b16 %v566
        %v761 = vunpack.c.h.b16 %v566
        %v762 = vunpack.c.l.b16 %v567
        %v763 = vunpack.c.h.b16 %v567
        %v764 = vunpack.c.l.b16 %v568
        %v765 = vunpack.c.h.b16 %v568
        %v766 = vunpack.c.l.b16 %v569
        %v767 = vunpack.c.h.b16 %v569
        %v768 = vunpack.c.l.b16 %v570
        %v769 = vunpack.c.h.b16 %v570
        %v770 = vunpack.c.l.b16 %v571
        %v771 = vunpack.c.h.b16 %v571
        %v772 = vunpack.c.l.b16 %v572
        %v773 = vunpack.c.h.b16 %v572
        %v774 = vunpack.c.l.b16 %v573
        %v775 = vunpack.c.h.b16 %v573
        %v776 = vunpack.c.l.b16 %v574
        %v777 = vunpack.c.h.b16 %v574
        %v778 = vunpack.c.l.b16 %v575
        %v779 = vunpack.c.h.b16 %v575
        %v780 = vunpack.c.l.b16 %v576
        %v781 = vunpack.c.h.b16 %v576
        %v782 = vunpack.c.l.b16 %v577
        %v783 = vunpack.c.h.b16 %v577
        %v784 = vunpack.c.l.b16 %v578
        %v785 = vunpack.c.h.b16 %v578
        %v786 = vunpack.c.l.b16 %v579
        %v787 = vunpack.c.h.b16 %v579
        %v788 = vunpack.c.l.b16 %v580
        %v789 = vunpack.c.h.b16 %v580
        %v790 = vunpack.c.l.b16 %v581
        %v791 = vunpack.c.h.b16 %v581
        %v792 = vunpack.c.l.b16 %v582
        %v793 = vunpack.c.h.b16 %v582
        %v794 = vunpack.c.l.b16 %v583
        %v795 = vunpack.c.h.b16 %v583
        %v796 = vunpack.c.l.b16 %v584
        %v797 = vunpack.c.h.b16 %v584
        %v798 = vunpack.c.l.b16 %v585
        %v799 = vunpack.c.h.b16 %v585
        %v800 = vunpack.c.l.b16 %v586
        %v801 = vunpack.c.h.b16 %v586
        %v802 = vunpack.c.l.b16 %v587
        %v803 = vunpack.c.h.b16 %v587
        %v804 = vunpack.c.l.b16 %v588
        %v805 = vunpack.c.h.b16 %v588
        %v806 = vunpack.c.l.b16 %v589
        %v807 = vunpack.c.h.b16 %v589
        %v808 = vunpack.c.l.b16 %v590
        %v809 = vunpack.c.h.b16 %v590
        %v810 = vunpack.c.l.b16 %v591
        %v811 = vunpack.c.h.b16 %v591
        %v812 = vunpack.c.l.b16 %v592
        %v813 = vunpack.c.h.b16 %v592
        %v814 = vunpack.c.l.b16 %v593
        %v815 = vunpack.c.h.b16 %v593
        %v816 = vunpack.c.l.b16 %v594
        %v817 = vunpack.c.h.b16 %v594
        %v818 = vunpack.c.l.b16 %v595
        %v819 = vunpack.c.h.b16 %v595
        %v820 = vpack.c.b16 %v694, %v692
        %v821 = vpack.c.b16 %v695, %v693
        %v822 = vpack.c.b16 %v698, %v696
        %v823 = vpack.c.b16 %v699, %v697
        %v824 = vpack.c.b16 %v702, %v700
        %v825 = vpack.c.b16 %v703, %v701
        %v826 = vpack.c.b16 %v706, %v704
        %v827 = vpack.c.b16 %v707, %v705
        %v828 = vpack.c.b16 %v710, %v708
        %v829 = vpack.c.b16 %v711, %v709
        %v830 = vpack.c.b16 %v714, %v712
        %v831 = vpack.c.b16 %v715, %v713
        %v832 = vpack.c.b16 %v718, %v716
        %v833 = vpack.c.b16 %v719, %v717
        %v834 = vpack.c.b16 %v722, %v720
        %v835 = vpack.c.b16 %v723, %v721
        %v836 = vpack.c.b16 %v726, %v724
        %v837 = vpack.c.b16 %v727, %v725
        %v838 = vpack.c.b16 %v730, %v728
        %v839 = vpack.c.b16 %v731, %v729
        %v840 = vpack.c.b16 %v734, %v732
        %v841 = vpack.c.b16 %v735, %v733
        %v842 = vpack.c.b16 %v738, %v736
        %v843 = vpack.c.b16 %v739, %v737
        %v844 = vpack.c.b16 %v742, %v740
        %v845 = vpack.c.b16 %v743, %v741
        %v846 = vpack.c.b16 %v746, %v744
        %v847 = vpack.c.b16 %v747, %v745
        %v848 = vpack.c.b16 %v750, %v748
        %v849 = vpack.c.b16 %v751, %v749
        %v850 = vpack.c.b16 %v754, %v752
        %v851 = vpack.c.b16 %v755, %v753
        %v852 = vpack.c.b16 %v758, %v756
        %v853 = vpack.c.b16 %v759, %v757
        %v854 = vpack.c.b16 %v762, %v760
        %v855 = vpack.c.b16 %v763, %v761
        %v856 = vpack.c.b16 %v766, %v764
        %v857 = vpack.c.b16 %v767, %v765
        %v858 = vpack.c.b16 %v770, %v768
        %v859 = vpack.c.b16 %v771, %v769
        %v860 = vpack.c.b16 %v774, %v772
        %v861 = vpack.c.b16 %v775, %v773
        %v862 = vpack.c.b16 %v778, %v776
        %v863 = vpack.c.b16 %v779, %v777
        %v864 = vpack.c.b16 %v782, %v780
        %v865 = vpack.c.b16 %v783, %v781
        %v866 = vpack.c.b16 %v786, %v784
        %v867 = vpack.c.b16 %v787, %v785
        %v868 = vpack.c.b16 %v790, %v788
        %v869 = vpack.c.b16 %v791, %v789
        %v870 = vpack.c.b16 %v794, %v792
        %v871 = vpack.c.b16 %v795, %v793
        %v872 = vpack.c.b16 %v798, %v796
        %v873 = vpack.c.b16 %v799, %v797
        %v874 = vpack.c.b16 %v802, %v800
        %v875 = vpack.c.b16 %v803, %v801
        %v876 = vpack.c.b16 %v806, %v804
        %v877 = vpack.c.b16 %v807, %v805
        %v878 = vpack.c.b16 %v810, %v808
        %v879 = vpack.c.b16 %v811, %v809
        %v880 = vpack.c.b16 %v814, %v812
        %v881 = vpack.c.b16 %v815, %v813
        %v882 = vpack.c.b16 %v818, %v816
        %v883 = vpack.c.b16 %v819, %v817
        %948 = vmatprep.subr.bf16.mxu0 %v821
        %949 = vmatpush1.bf16.msra.mxu0 %v820
        %950 = vmatprep.subr.bf16.mxu0 %v823
        %951 = vmatpush1.bf16.msra.mxu0 %v822
        %952 = vmatprep.subr.bf16.mxu0 %v825
        %953 = vmatpush1.bf16.msra.mxu0 %v824
        %954 = vmatprep.subr.bf16.mxu0 %v827
        %955 = vmatpush1.bf16.msra.mxu0 %v826
        %956 = vmatprep.subr.bf16.mxu0 %v829
        %957 = vmatpush1.bf16.msra.mxu0 %v828
        %958 = vmatprep.subr.bf16.mxu0 %v831
        %959 = vmatpush1.bf16.msra.mxu0 %v830
        %960 = vmatprep.subr.bf16.mxu0 %v833
        %961 = vmatpush1.bf16.msra.mxu0 %v832
        %962 = vmatprep.subr.bf16.mxu0 %v835
        %963 = vmatpush1.bf16.msra.mxu0 %v834
        %964 = vmatprep.subr.bf16.mxu0 %v837
        %965 = vmatpush1.bf16.msra.mxu0 %v836
        %966 = vmatprep.subr.bf16.mxu0 %v839
        %967 = vmatpush1.bf16.msra.mxu0 %v838
        %968 = vmatprep.subr.bf16.mxu0 %v841
        %969 = vmatpush1.bf16.msra.mxu0 %v840
        %970 = vmatprep.subr.bf16.mxu0 %v843
        %971 = vmatpush1.bf16.msra.mxu0 %v842
        %972 = vmatprep.subr.bf16.mxu0 %v845
        %973 = vmatpush1.bf16.msra.mxu0 %v844
        %974 = vmatprep.subr.bf16.mxu0 %v847
        %975 = vmatpush1.bf16.msra.mxu0 %v846
        %976 = vmatprep.subr.bf16.mxu0 %v849
        %977 = vmatpush1.bf16.msra.mxu0 %v848
        %978 = vmatprep.subr.bf16.mxu0 %v851
        %979 = vmatpush1.bf16.msra.mxu0 %v850
        %980 = vmatprep.mubr.bf16.mxu0 %v621
        %981 = vmatmul.mubr.bf16.gmra.mrb[0].mxu0 %v620
        %v982 = vpop.f32.mrb[0].mxu0
        %v983 = vadd.f32 %v601, %v982
        %v984 = vpop.f32.mrb[0].mxu0
        %v985 = vadd.f32 %v605, %v984
        %v986 = vpop.f32.mrb[0].mxu0
        %v987 = vadd.f32 %v601, %v986
        %v988 = vpop.f32.mrb[0].mxu0
        %v989 = vadd.f32 %v605, %v988
        %990 = vdwg.mxu0
        %991 = vmatprep.subr.bf16.mxu0 %v853
        %992 = vmatpush1.bf16.msra.mxu0 %v852
        %993 = vmatprep.subr.bf16.mxu0 %v855
        %994 = vmatpush1.bf16.msra.mxu0 %v854
        %995 = vmatprep.subr.bf16.mxu0 %v857
        %996 = vmatpush1.bf16.msra.mxu0 %v856
        %997 = vmatprep.subr.bf16.mxu0 %v859
        %998 = vmatpush1.bf16.msra.mxu0 %v858
        %999 = vmatprep.subr.bf16.mxu0 %v861
        %1000 = vmatpush1.bf16.msra.mxu0 %v860
        %1001 = vmatprep.subr.bf16.mxu0 %v863
        %1002 = vmatpush1.bf16.msra.mxu0 %v862
        %1003 = vmatprep.subr.bf16.mxu0 %v865
        %1004 = vmatpush1.bf16.msra.mxu0 %v864
        %1005 = vmatprep.subr.bf16.mxu0 %v867
        %1006 = vmatpush1.bf16.msra.mxu0 %v866
        %1007 = vmatprep.subr.bf16.mxu0 %v869
        %1008 = vmatpush1.bf16.msra.mxu0 %v868
        %1009 = vmatprep.subr.bf16.mxu0 %v871
        %1010 = vmatpush1.bf16.msra.mxu0 %v870
        %1011 = vmatprep.subr.bf16.mxu0 %v873
        %1012 = vmatpush1.bf16.msra.mxu0 %v872
        %1013 = vmatprep.subr.bf16.mxu0 %v875
        %1014 = vmatpush1.bf16.msra.mxu0 %v874
        %1015 = vmatprep.subr.bf16.mxu0 %v877
        %1016 = vmatpush1.bf16.msra.mxu0 %v876
        %1017 = vmatprep.subr.bf16.mxu0 %v879
        %1018 = vmatpush1.bf16.msra.mxu0 %v878
        %1019 = vmatprep.subr.bf16.mxu0 %v881
        %1020 = vmatpush1.bf16.msra.mxu0 %v880
        %1021 = vmatprep.subr.bf16.mxu0 %v883
        %1022 = vmatpush1.bf16.msra.mxu0 %v882
        %1023 = vmatprep.mubr.bf16.mxu0 %v623
        %1024 = vmatmul.mubr.bf16.gmra.mrb[0].mxu0 %v622
        %v1025 = vpop.f32.mrb[0].mxu0
        %v1026 = vadd.f32 %v983, %v1025
        %v1027 = vpop.f32.mrb[0].mxu0
        %v1028 = vadd.f32 %v985, %v1027
        %v1029 = vpop.f32.mrb[0].mxu0
        %v1030 = vadd.f32 %v987, %v1029
        %v1031 = vpop.f32.mrb[0].mxu0
        %v1032 = vadd.f32 %v989, %v1031
        %1033 = vdwg.mxu0
        %vm1034 = vcmp.gt.f32.partialorder %v1026, 0.0
        %vm1035 = vcmp.gt.f32.partialorder %v1028, 0.0
        %vm1036 = vcmp.gt.f32.partialorder %v1030, 0.0
        %vm1037 = vcmp.gt.f32.partialorder %v1032, 0.0
        %v1038 = vmul.f32 %v1026, 0.01
        %v1039 = vmul.f32 %v1028, 0.01
        %v1040 = vmul.f32 %v1030, 0.01
        %v1041 = vmul.f32 %v1032, 0.01
        %v1042 = vsel %vm1034, %v1026, %v1038
        %v1043 = vsel %vm1035, %v1028, %v1039
        %v1044 = vsel %vm1036, %v1030, %v1040
        %v1045 = vsel %vm1037, %v1032, %v1041
        %v1046 = vpack.c.bf16 %v1044, %v1042
        %v1047 = vpack.c.bf16 %v1045, %v1043
        %v1048 = vld [vmem:[#allocation5] sm:$0xf]
        %v1049 = vld [vmem:[#allocation5 + $0x4] sm:$0xf]
        %v1050 = vld [vmem:[#allocation5 + $0x8] sm:$0xf]
        %v1051 = vld [vmem:[#allocation5 + $0xc] sm:$0xf]
        %v1052 = vld [vmem:[#allocation5 + $0x10] sm:$0xf]
        %v1053 = vld [vmem:[#allocation5 + $0x14] sm:$0xf]
        %v1054 = vld [vmem:[#allocation5 + $0x18] sm:$0xf]
        %v1055 = vld [vmem:[#allocation5 + $0x1c] sm:$0xf]
        %v1056 = vld [vmem:[#allocation5 + $0x20] sm:$0xf]
        %v1057 = vld [vmem:[#allocation5 + $0x24] sm:$0xf]
        %v1058 = vld [vmem:[#allocation5 + $0x28] sm:$0xf]
        %v1059 = vld [vmem:[#allocation5 + $0x2c] sm:$0xf]
        %v1060 = vld [vmem:[#allocation5 + $0x30] sm:$0xf]
        %v1061 = vld [vmem:[#allocation5 + $0x34] sm:$0xf]
        %v1062 = vld [vmem:[#allocation5 + $0x38] sm:$0xf]
        %v1063 = vld [vmem:[#allocation5 + $0x3c] sm:$0xf]
        %v1064 = vld [vmem:[#allocation5 + $0x40] sm:$0xf]
        %v1065 = vld [vmem:[#allocation5 + $0x44] sm:$0xf]
        %v1066 = vld [vmem:[#allocation5 + $0x48] sm:$0xf]
        %v1067 = vld [vmem:[#allocation5 + $0x4c] sm:$0xf]
        %v1068 = vld [vmem:[#allocation5 + $0x50] sm:$0xf]
        %v1069 = vld [vmem:[#allocation5 + $0x54] sm:$0xf]
        %v1070 = vld [vmem:[#allocation5 + $0x58] sm:$0xf]
        %v1071 = vld [vmem:[#allocation5 + $0x5c] sm:$0xf]
        %v1072 = vld [vmem:[#allocation5 + $0x60] sm:$0xf]
        %v1073 = vld [vmem:[#allocation5 + $0x64] sm:$0xf]
        %v1074 = vld [vmem:[#allocation5 + $0x68] sm:$0xf]
        %v1075 = vld [vmem:[#allocation5 + $0x6c] sm:$0xf]
        %v1076 = vld [vmem:[#allocation5 + $0x70] sm:$0xf]
        %v1077 = vld [vmem:[#allocation5 + $0x74] sm:$0xf]
        %v1078 = vld [vmem:[#allocation5 + $0x78] sm:$0xf]
        %v1079 = vld [vmem:[#allocation5 + $0x7c] sm:$0xf]
        %v1080 = vld [vmem:[#allocation7] sm:$0x1]
        %v1082 = vlaneseq
        %v1083 = vshrl.u32 %v1082, 7
        %v1084 = vsub.s32 0, %v1083
        %v1085 = vrot.slane %v1080, %v1084
        %v1119 = vunpack.c.l.b16 %v1048
        %v1120 = vunpack.c.l.b16 %v1049
        %v1121 = vunpack.c.l.b16 %v1050
        %v1122 = vunpack.c.l.b16 %v1051
        %v1123 = vunpack.c.l.b16 %v1052
        %v1124 = vunpack.c.l.b16 %v1053
        %v1125 = vunpack.c.l.b16 %v1054
        %v1126 = vunpack.c.l.b16 %v1055
        %v1127 = vunpack.c.l.b16 %v1056
        %v1128 = vunpack.c.l.b16 %v1057
        %v1129 = vunpack.c.l.b16 %v1058
        %v1130 = vunpack.c.l.b16 %v1059
        %v1131 = vunpack.c.l.b16 %v1060
        %v1132 = vunpack.c.l.b16 %v1061
        %v1133 = vunpack.c.l.b16 %v1062
        %v1134 = vunpack.c.l.b16 %v1063
        %v1135 = vunpack.c.l.b16 %v1064
        %v1136 = vunpack.c.l.b16 %v1065
        %v1137 = vunpack.c.l.b16 %v1066
        %v1138 = vunpack.c.l.b16 %v1067
        %v1139 = vunpack.c.l.b16 %v1068
        %v1140 = vunpack.c.l.b16 %v1069
        %v1141 = vunpack.c.l.b16 %v1070
        %v1142 = vunpack.c.l.b16 %v1071
        %v1143 = vunpack.c.l.b16 %v1072
        %v1144 = vunpack.c.l.b16 %v1073
        %v1145 = vunpack.c.l.b16 %v1074
        %v1146 = vunpack.c.l.b16 %v1075
        %v1147 = vunpack.c.l.b16 %v1076
        %v1148 = vunpack.c.l.b16 %v1077
        %v1149 = vunpack.c.l.b16 %v1078
        %v1150 = vunpack.c.l.b16 %v1079
        %v1151 = vpack.c.b16 %v1120, %v1119
        %v1152 = vpack.c.b16 %v1122, %v1121
        %v1153 = vpack.c.b16 %v1124, %v1123
        %v1154 = vpack.c.b16 %v1126, %v1125
        %v1155 = vpack.c.b16 %v1128, %v1127
        %v1156 = vpack.c.b16 %v1130, %v1129
        %v1157 = vpack.c.b16 %v1132, %v1131
        %v1158 = vpack.c.b16 %v1134, %v1133
        %v1159 = vpack.c.b16 %v1136, %v1135
        %v1160 = vpack.c.b16 %v1138, %v1137
        %v1161 = vpack.c.b16 %v1140, %v1139
        %v1162 = vpack.c.b16 %v1142, %v1141
        %v1163 = vpack.c.b16 %v1144, %v1143
        %v1164 = vpack.c.b16 %v1146, %v1145
        %v1165 = vpack.c.b16 %v1148, %v1147
        %v1166 = vpack.c.b16 %v1150, %v1149
        %1183 = vmatprep.subr.bf16.mxu0 0
        %1184 = vmatpush1.bf16.msra.mxu0 %v1151
        %1185 = vmatprep.subr.bf16.mxu0 0
        %1186 = vmatpush1.bf16.msra.mxu0 %v1152
        %1187 = vmatprep.subr.bf16.mxu0 0
        %1188 = vmatpush1.bf16.msra.mxu0 %v1153
        %1189 = vmatprep.subr.bf16.mxu0 0
        %1190 = vmatpush1.bf16.msra.mxu0 %v1154
        %1191 = vmatprep.subr.bf16.mxu0 0
        %1192 = vmatpush1.bf16.msra.mxu0 %v1155
        %1193 = vmatprep.subr.bf16.mxu0 0
        %1194 = vmatpush1.bf16.msra.mxu0 %v1156
        %1195 = vmatprep.subr.bf16.mxu0 0
        %1196 = vmatpush1.bf16.msra.mxu0 %v1157
        %1197 = vmatprep.subr.bf16.mxu0 0
        %1198 = vmatpush1.bf16.msra.mxu0 %v1158
        %1199 = vmatprep.subr.bf16.mxu0 0
        %1200 = vmatpush1.bf16.msra.mxu0 %v1159
        %1201 = vmatprep.subr.bf16.mxu0 0
        %1202 = vmatpush1.bf16.msra.mxu0 %v1160
        %1203 = vmatprep.subr.bf16.mxu0 0
        %1204 = vmatpush1.bf16.msra.mxu0 %v1161
        %1205 = vmatprep.subr.bf16.mxu0 0
        %1206 = vmatpush1.bf16.msra.mxu0 %v1162
        %1207 = vmatprep.subr.bf16.mxu0 0
        %1208 = vmatpush1.bf16.msra.mxu0 %v1163
        %1209 = vmatprep.subr.bf16.mxu0 0
        %1210 = vmatpush1.bf16.msra.mxu0 %v1164
        %1211 = vmatprep.subr.bf16.mxu0 0
        %1212 = vmatpush1.bf16.msra.mxu0 %v1165
        %1213 = vmatprep.subr.bf16.mxu0 0
        %1214 = vmatpush1.bf16.msra.mxu0 %v1166
        %1215 = vmatprep.mubr.bf16.mxu0 %v1047
        %1216 = vmatmul.mubr.bf16.gmra.mrb[0].mxu0 %v1046
        %v1217 = vpop.f32.mrb[0].mxu0
        %v1218 = vadd.f32 %v1085, %v1217
        %v1219 = vpop.f32.mrb[0].mxu0
        %v1220 = vpop.f32.mrb[0].mxu0
        %v1221 = vadd.f32 %v1085, %v1220
        %v1222 = vpop.f32.mrb[0].mxu0
        %1223 = vdwg.mxu0
        %vm1224 = vcmp.gt.f32.partialorder %v1218, 0.0
        %vm1225 = vcmp.gt.f32.partialorder %v1221, 0.0
        %v1226 = vmul.f32 %v1218, 0.01
        %v1227 = vmul.f32 %v1221, 0.01
        %v1228 = vsel %vm1224, %v1218, %v1226
        %v1229 = vsel %vm1225, %v1221, %v1227
        %v1230 = vpack.c.bf16 %v1229, %v1228
        %v1231 = vld [vmem:[%s5] sm:$0xf]
        %v1232 = vld [vmem:[%s5 + $0x4] sm:$0xf]
        %v1233 = vld [vmem:[%s5 + $0x8] sm:$0xf]
        %v1234 = vld [vmem:[%s5 + $0xc] sm:$0xf]
        %v1235 = vld [vmem:[%s5 + $0x10] sm:$0xf]
        %v1236 = vld [vmem:[%s5 + $0x14] sm:$0xf]
        %v1237 = vld [vmem:[%s5 + $0x18] sm:$0xf]
        %v1238 = vld [vmem:[%s5 + $0x1c] sm:$0xf]
        %v1239 = vld [vmem:[%s5 + $0x20] sm:$0xf]
        %v1240 = vld [vmem:[%s5 + $0x24] sm:$0xf]
        %v1241 = vld [vmem:[%s5 + $0x28] sm:$0xf]
        %v1242 = vld [vmem:[%s5 + $0x2c] sm:$0xf]
        %v1243 = vld [vmem:[%s5 + $0x30] sm:$0xf]
        %v1244 = vld [vmem:[%s5 + $0x34] sm:$0xf]
        %v1245 = vld [vmem:[%s5 + $0x38] sm:$0xf]
        %v1246 = vld [vmem:[%s5 + $0x3c] sm:$0xf]
        %v1247 = vld [vmem:[#allocation8] sm:$0x1]
        %v1249 = vlaneseq
        %v1250 = vshrl.u32 %v1249, 7
        %v1251 = vsub.s32 0, %v1250
        %v1252 = vrot.slane %v1247, %v1251
        %v1270 = vunpack.c.l.b16 %v1231
        %v1271 = vunpack.c.l.b16 %v1232
        %v1272 = vunpack.c.l.b16 %v1233
        %v1273 = vunpack.c.l.b16 %v1234
        %v1274 = vunpack.c.l.b16 %v1235
        %v1275 = vunpack.c.l.b16 %v1236
        %v1276 = vunpack.c.l.b16 %v1237
        %v1277 = vunpack.c.l.b16 %v1238
        %v1278 = vunpack.c.l.b16 %v1239
        %v1279 = vunpack.c.l.b16 %v1240
        %v1280 = vunpack.c.l.b16 %v1241
        %v1281 = vunpack.c.l.b16 %v1242
        %v1282 = vunpack.c.l.b16 %v1243
        %v1283 = vunpack.c.l.b16 %v1244
        %v1284 = vunpack.c.l.b16 %v1245
        %v1285 = vunpack.c.l.b16 %v1246
        %v1286 = vpack.c.b16 %v1271, %v1270
        %v1287 = vpack.c.b16 %v1273, %v1272
        %v1288 = vpack.c.b16 %v1275, %v1274
        %v1289 = vpack.c.b16 %v1277, %v1276
        %v1290 = vpack.c.b16 %v1279, %v1278
        %v1291 = vpack.c.b16 %v1281, %v1280
        %v1292 = vpack.c.b16 %v1283, %v1282
        %v1293 = vpack.c.b16 %v1285, %v1284
        %1302 = vmatprep.subr.bf16.mxu0 0
        %1303 = vmatpush1.bf16.msra.mxu0 %v1286
        %1304 = vmatprep.subr.bf16.mxu0 0
        %1305 = vmatpush1.bf16.msra.mxu0 %v1287
        %1306 = vmatprep.subr.bf16.mxu0 0
        %1307 = vmatpush1.bf16.msra.mxu0 %v1288
        %1308 = vmatprep.subr.bf16.mxu0 0
        %1309 = vmatpush1.bf16.msra.mxu0 %v1289
        %1310 = vmatprep.subr.bf16.mxu0 0
        %1311 = vmatpush1.bf16.msra.mxu0 %v1290
        %1312 = vmatprep.subr.bf16.mxu0 0
        %1313 = vmatpush1.bf16.msra.mxu0 %v1291
        %1314 = vmatprep.subr.bf16.mxu0 0
        %1315 = vmatpush1.bf16.msra.mxu0 %v1292
        %1316 = vmatprep.subr.bf16.mxu0 0
        %1317 = vmatpush1.bf16.msra.mxu0 %v1293
        %1318 = vmatprep.subr.bf16.mxu0 0
        %1319 = vmatpush1.bf16.msra.mxu0 0
        %1320 = vmatprep.subr.bf16.mxu0 0
        %1321 = vmatpush1.bf16.msra.mxu0 0
        %1322 = vmatprep.subr.bf16.mxu0 0
        %1323 = vmatpush1.bf16.msra.mxu0 0
        %1324 = vmatprep.subr.bf16.mxu0 0
        %1325 = vmatpush1.bf16.msra.mxu0 0
        %1326 = vmatprep.subr.bf16.mxu0 0
        %1327 = vmatpush1.bf16.msra.mxu0 0
        %1328 = vmatprep.subr.bf16.mxu0 0
        %1329 = vmatpush1.bf16.msra.mxu0 0
        %1330 = vmatprep.subr.bf16.mxu0 0
        %1331 = vmatpush1.bf16.msra.mxu0 0
        %1332 = vmatprep.subr.bf16.mxu0 0
        %1333 = vmatpush1.bf16.msra.mxu0 0
        %1334 = vmatprep.mubr.bf16.mxu0 0
        %1335 = vmatmul.mubr.bf16.gmra.mrb[0].mxu0 %v1230
        %v1336 = vpop.f32.mrb[0].mxu0
        %v1337 = vadd.f32 %v1252, %v1336
        %v1338 = vpop.f32.mrb[0].mxu0
        %v1339 = vpop.f32.mrb[0].mxu0
        %v1340 = vadd.f32 %v1252, %v1339
        %v1341 = vpop.f32.mrb[0].mxu0
        %1342 = vdwg.mxu0
        %vm1343 = vcmp.gt.f32.partialorder %v1337, 0.0
        %vm1344 = vcmp.gt.f32.partialorder %v1340, 0.0
        %v1345 = vmul.f32 %v1337, 0.01
        %v1346 = vmul.f32 %v1340, 0.01
        %v1347 = vsel %vm1343, %v1337, %v1345
        %v1348 = vsel %vm1344, %v1340, %v1346
        %v1349 = vpack.c.bf16 %v1348, %v1347
        %v1350 = vld [vmem:[%s7] sm:$0xf]
        %v1351 = vld [vmem:[%s7 + $0x4] sm:$0xf]
        %v1352 = vld [vmem:[%s7 + $0x8] sm:$0xf]
        %v1353 = vld [vmem:[%s7 + $0xc] sm:$0xf]
        %v1354 = vld [vmem:[%s7 + $0x10] sm:$0xf]
        %v1355 = vld [vmem:[%s7 + $0x14] sm:$0xf]
        %v1356 = vld [vmem:[%s7 + $0x18] sm:$0xf]
        %v1357 = vld [vmem:[%s7 + $0x1c] sm:$0xf]
        %v1358 = vld [vmem:[#allocation10] sm:$0x1]
        %v1360 = vlaneseq
        %v1361 = vshrl.u32 %v1360, 7
        %v1362 = vsub.s32 0, %v1361
        %v1363 = vrot.slane %v1358, %v1362
        %v1373 = vunpack.c.l.b16 %v1350
        %v1374 = vunpack.c.l.b16 %v1351
        %v1375 = vunpack.c.l.b16 %v1352
        %v1376 = vunpack.c.l.b16 %v1353
        %v1377 = vunpack.c.l.b16 %v1354
        %v1378 = vunpack.c.l.b16 %v1355
        %v1379 = vunpack.c.l.b16 %v1356
        %v1380 = vunpack.c.l.b16 %v1357
        %v1381 = vpack.c.b16 %v1374, %v1373
        %v1382 = vpack.c.b16 %v1376, %v1375
        %v1383 = vpack.c.b16 %v1378, %v1377
        %v1384 = vpack.c.b16 %v1380, %v1379
        %vm1389 = vcmask 523264
        %v1391 = vsel %vm1389, %v1349, 0
        %1393 = vmatprep.subr.bf16.mxu0 0
        %1394 = vmatpush1.bf16.msra.mxu0 %v1381
        %1395 = vmatprep.subr.bf16.mxu0 0
        %1396 = vmatpush1.bf16.msra.mxu0 %v1382
        %1397 = vmatprep.subr.bf16.mxu0 0
        %1398 = vmatpush1.bf16.msra.mxu0 %v1383
        %1399 = vmatprep.subr.bf16.mxu0 0
        %1400 = vmatpush1.bf16.msra.mxu0 %v1384
        %1401 = vmatprep.subr.bf16.mxu0 0
        %1402 = vmatpush1.bf16.msra.mxu0 0
        %1403 = vmatprep.subr.bf16.mxu0 0
        %1404 = vmatpush1.bf16.msra.mxu0 0
        %1405 = vmatprep.subr.bf16.mxu0 0
        %1406 = vmatpush1.bf16.msra.mxu0 0
        %1407 = vmatprep.subr.bf16.mxu0 0
        %1408 = vmatpush1.bf16.msra.mxu0 0
        %1409 = vmatprep.subr.bf16.mxu0 0
        %1410 = vmatpush1.bf16.msra.mxu0 0
        %1411 = vmatprep.subr.bf16.mxu0 0
        %1412 = vmatpush1.bf16.msra.mxu0 0
        %1413 = vmatprep.subr.bf16.mxu0 0
        %1414 = vmatpush1.bf16.msra.mxu0 0
        %1415 = vmatprep.subr.bf16.mxu0 0
        %1416 = vmatpush1.bf16.msra.mxu0 0
        %1417 = vmatprep.subr.bf16.mxu0 0
        %1418 = vmatpush1.bf16.msra.mxu0 0
        %1419 = vmatprep.subr.bf16.mxu0 0
        %1420 = vmatpush1.bf16.msra.mxu0 0
        %1421 = vmatprep.subr.bf16.mxu0 0
        %1422 = vmatpush1.bf16.msra.mxu0 0
        %1423 = vmatprep.subr.bf16.mxu0 0
        %1424 = vmatpush1.bf16.msra.mxu0 0
        %1425 = vmatprep.mubr.bf16.mxu0 0
        %1426 = vmatmul.mubr.bf16.gmra.mrb[0].mxu0 %v1391
        %v1427 = vpop.f32.mrb[0].mxu0
        %v1428 = vadd.f32 %v1363, %v1427
        %v1429 = vpop.f32.mrb[0].mxu0
        %v1430 = vpop.f32.mrb[0].mxu0
        %v1431 = vadd.f32 %v1363, %v1430
        %v1432 = vpop.f32.mrb[0].mxu0
        %1433 = vdwg.mxu0
        %vm1434 = vcmp.gt.f32.partialorder %v1428, 0.0
        %vm1435 = vcmp.gt.f32.partialorder %v1431, 0.0
        %v1436 = vmul.f32 %v1428, 0.01
        %v1437 = vmul.f32 %v1431, 0.01
        %v1438 = vsel %vm1434, %v1428, %v1436
        %v1439 = vsel %vm1435, %v1431, %v1437
        %v1440 = vpack.c.bf16 %v1439, %v1438
        %v1441 = vld [vmem:[%s9] sm:$0xf]
        %v1442 = vld [vmem:[%s9 + $0x4] sm:$0xf]
        %v1443 = vld [vmem:[%s9 + $0x8] sm:$0xf]
        %v1444 = vld [vmem:[%s9 + $0xc] sm:$0xf]
        %v1445 = vld [vmem:[%s9 + $0x10] sm:$0xf]
        %v1446 = vld [vmem:[%s9 + $0x14] sm:$0xf]
        %v1447 = vld [vmem:[%s9 + $0x18] sm:$0xf]
        %v1448 = vld [vmem:[%s9 + $0x1c] sm:$0xf]
        %v1449 = vld [vmem:[%s10] sm:$0x1]
        %v1451 = vlaneseq
        %v1452 = vshrl.u32 %v1451, 7
        %v1453 = vsub.s32 0, %v1452
        %v1454 = vrot.slane %v1449, %v1453
        %v1464 = vunpack.c.l.b16 %v1441
        %v1465 = vunpack.c.l.b16 %v1442
        %v1466 = vunpack.c.l.b16 %v1443
        %v1467 = vunpack.c.l.b16 %v1444
        %v1468 = vunpack.c.l.b16 %v1445
        %v1469 = vunpack.c.l.b16 %v1446
        %v1470 = vunpack.c.l.b16 %v1447
        %v1471 = vunpack.c.l.b16 %v1448
        %v1472 = vpack.c.b16 %v1465, %v1464
        %v1473 = vpack.c.b16 %v1467, %v1466
        %v1474 = vpack.c.b16 %v1469, %v1468
        %v1475 = vpack.c.b16 %v1471, %v1470
        %v1481 = vsel %vm1389, %v1440, 0
        %1483 = vmatprep.subr.bf16.mxu0 0
        %1484 = vmatpush1.bf16.msra.mxu0 %v1472
        %1485 = vmatprep.subr.bf16.mxu0 0
        %1486 = vmatpush1.bf16.msra.mxu0 %v1473
        %1487 = vmatprep.subr.bf16.mxu0 0
        %1488 = vmatpush1.bf16.msra.mxu0 %v1474
        %1489 = vmatprep.subr.bf16.mxu0 0
        %1490 = vmatpush1.bf16.msra.mxu0 %v1475
        %1491 = vmatprep.subr.bf16.mxu0 0
        %1492 = vmatpush1.bf16.msra.mxu0 0
        %1493 = vmatprep.subr.bf16.mxu0 0
        %1494 = vmatpush1.bf16.msra.mxu0 0
        %1495 = vmatprep.subr.bf16.mxu0 0
        %1496 = vmatpush1.bf16.msra.mxu0 0
        %1497 = vmatprep.subr.bf16.mxu0 0
        %1498 = vmatpush1.bf16.msra.mxu0 0
        %1499 = vmatprep.subr.bf16.mxu0 0
        %1500 = vmatpush1.bf16.msra.mxu0 0
        %1501 = vmatprep.subr.bf16.mxu0 0
        %1502 = vmatpush1.bf16.msra.mxu0 0
        %1503 = vmatprep.subr.bf16.mxu0 0
        %1504 = vmatpush1.bf16.msra.mxu0 0
        %1505 = vmatprep.subr.bf16.mxu0 0
        %1506 = vmatpush1.bf16.msra.mxu0 0
        %1507 = vmatprep.subr.bf16.mxu0 0
        %1508 = vmatpush1.bf16.msra.mxu0 0
        %1509 = vmatprep.subr.bf16.mxu0 0
        %1510 = vmatpush1.bf16.msra.mxu0 0
        %1511 = vmatprep.subr.bf16.mxu0 0
        %1512 = vmatpush1.bf16.msra.mxu0 0
        %1513 = vmatprep.subr.bf16.mxu0 0
        %1514 = vmatpush1.bf16.msra.mxu0 0
        %1515 = vmatprep.mubr.bf16.mxu0 0
        %1516 = vmatmul.mubr.bf16.gmra.mrb[0].mxu0 %v1481
        %v1517 = vpop.f32.mrb[0].mxu0
        %v1518 = vadd.f32 %v1454, %v1517
        %v1519 = vpop.f32.mrb[0].mxu0
        %v1520 = vpop.f32.mrb[0].mxu0
        %v1521 = vadd.f32 %v1454, %v1520
        %v1522 = vpop.f32.mrb[0].mxu0
        %1523 = vdwg.mxu0
        %vm1524 = vcmp.gt.f32.partialorder %v1518, 0.0
        %vm1525 = vcmp.gt.f32.partialorder %v1521, 0.0
        %v1526 = vmul.f32 %v1518, 0.01
        %v1527 = vmul.f32 %v1521, 0.01
        %v1528 = vsel %vm1524, %v1518, %v1526
        %v1529 = vsel %vm1525, %v1521, %v1527
        %v1530 = vpack.c.bf16 %v1529, %v1528
        %v1531 = vld [vmem:[#allocation11] sm:$0xf]
        %v1532 = vld [vmem:[#allocation11 + $0x4] sm:$0xf]
        %v1533 = vld [vmem:[#allocation11 + $0x8] sm:$0xf]
        %v1534 = vld [vmem:[#allocation11 + $0xc] sm:$0xf]
        %v1535 = vld [vmem:[#allocation11 + $0x10] sm:$0xf]
        %v1536 = vld [vmem:[#allocation11 + $0x14] sm:$0xf]
        %v1537 = vld [vmem:[#allocation11 + $0x18] sm:$0xf]
        %v1538 = vld [vmem:[#allocation11 + $0x1c] sm:$0xf]
        %v1539 = vld [vmem:[%s12] sm:$0x1]
        %v1541 = vlaneseq
        %v1542 = vshrl.u32 %v1541, 7
        %v1543 = vsub.s32 0, %v1542
        %v1544 = vrot.slane %v1539, %v1543
        %v1554 = vunpack.c.l.b16 %v1531
        %v1555 = vunpack.c.l.b16 %v1532
        %v1556 = vunpack.c.l.b16 %v1533
        %v1557 = vunpack.c.l.b16 %v1534
        %v1558 = vunpack.c.l.b16 %v1535
        %v1559 = vunpack.c.l.b16 %v1536
        %v1560 = vunpack.c.l.b16 %v1537
        %v1561 = vunpack.c.l.b16 %v1538
        %v1562 = vpack.c.b16 %v1555, %v1554
        %v1563 = vpack.c.b16 %v1557, %v1556
        %v1564 = vpack.c.b16 %v1559, %v1558
        %v1565 = vpack.c.b16 %v1561, %v1560
        %v1571 = vsel %vm1389, %v1530, 0
        %1573 = vmatprep.subr.bf16.mxu0 0
        %1574 = vmatpush1.bf16.msra.mxu0 %v1562
        %1575 = vmatprep.subr.bf16.mxu0 0
        %1576 = vmatpush1.bf16.msra.mxu0 %v1563
        %1577 = vmatprep.subr.bf16.mxu0 0
        %1578 = vmatpush1.bf16.msra.mxu0 %v1564
        %1579 = vmatprep.subr.bf16.mxu0 0
        %1580 = vmatpush1.bf16.msra.mxu0 %v1565
        %1581 = vmatprep.subr.bf16.mxu0 0
        %1582 = vmatpush1.bf16.msra.mxu0 0
        %1583 = vmatprep.subr.bf16.mxu0 0
        %1584 = vmatpush1.bf16.msra.mxu0 0
        %1585 = vmatprep.subr.bf16.mxu0 0
        %1586 = vmatpush1.bf16.msra.mxu0 0
        %1587 = vmatprep.subr.bf16.mxu0 0
        %1588 = vmatpush1.bf16.msra.mxu0 0
        %1589 = vmatprep.subr.bf16.mxu0 0
        %1590 = vmatpush1.bf16.msra.mxu0 0
        %1591 = vmatprep.subr.bf16.mxu0 0
        %1592 = vmatpush1.bf16.msra.mxu0 0
        %1593 = vmatprep.subr.bf16.mxu0 0
        %1594 = vmatpush1.bf16.msra.mxu0 0
        %1595 = vmatprep.subr.bf16.mxu0 0
        %1596 = vmatpush1.bf16.msra.mxu0 0
        %1597 = vmatprep.subr.bf16.mxu0 0
        %1598 = vmatpush1.bf16.msra.mxu0 0
        %1599 = vmatprep.subr.bf16.mxu0 0
        %1600 = vmatpush1.bf16.msra.mxu0 0
        %1601 = vmatprep.subr.bf16.mxu0 0
        %1602 = vmatpush1.bf16.msra.mxu0 0
        %1603 = vmatprep.subr.bf16.mxu0 0
        %1604 = vmatpush1.bf16.msra.mxu0 0
        %1605 = vmatprep.mubr.bf16.mxu0 0
        %1606 = vmatmul.mubr.bf16.gmra.mrb[0].mxu0 %v1571
        %v1607 = vpop.f32.mrb[0].mxu0
        %v1608 = vadd.f32 %v1544, %v1607
        %v1609 = vpop.f32.mrb[0].mxu0
        %v1610 = vpop.f32.mrb[0].mxu0
        %v1611 = vadd.f32 %v1544, %v1610
        %v1612 = vpop.f32.mrb[0].mxu0
        %1613 = vdwg.mxu0
        %1614 = vst [vmem:[%s518] sm:$0xff] %v1608
        %1615 = vst [vmem:[%s518 + $0x8] sm:$0xff] %v1611
        %s1616 = sand.u32 %s317, 1
        %s1617 = scalar_lea.sflag [#allocation4], %s1616
        %s1618 = sand.u32 %s317, 1
        %s1619 = smul.addr %s1618, 16
        %s1620 = scalar_lea.vmem [#allocation13], %s1619
        // Predicated region
        $region97: #{tpu_custom_call.1} parent=71 // pred_check
          %p1621 = pneg %p327
        $region98: #{tpu_custom_call.1} parent=71 // pred_check_branch
          %1623 = sbr.rel (%p1621) target = $region100
        $region99: #{tpu_custom_call.1} parent=71 // pred_region
          %s1624 = smul.u32 2, %s31
          %s1626 = ssub.s32 256, 256
          %1627 = vsyncadd %s1617, %s1626
          %s1628 = smul.addr %s1624, 128
          %s1629 = scalar_lea.hbm %s13, %s1628
          %s1630 = sshll.u32 %s1620, 4
          %s1631 = int_to_ptr.vmem [resolvable:$true] %s1630
          %1636 = dma.vmem_to_hbm [thread:$0]  %s1631, 256, %s1629, %s1617, 128, 128, 8
        $region100: #{tpu_custom_call.1} parent=71 // pred_fallthru
          _
      $region72: #{tpu_custom_call.1} parent=5 // pred_fallthru
        _
      %p1637 = scmp.le.s32.totalorder 2, %s26
      // Predicated region
      $region101: #{tpu_custom_call.1} parent=5 // pred_check
        %p1638 = pneg %p1637
      $region102: #{tpu_custom_call.1} parent=5 // pred_check_branch
        %1640 = sbr.rel (%p1638) target = $region104
      $region103: #{tpu_custom_call.1} parent=5 // pred_region
        %s1641 = ssub.s32 %s26, 2
        // Predicated region
        $region105: #{tpu_custom_call.1} parent=103 // pred_check
          %p1642 = pneg %p333
        $region106: #{tpu_custom_call.1} parent=103 // pred_check_branch
          %1644 = sbr.rel (%p1642) target = $region108
        $region107: #{tpu_custom_call.1} parent=103 // pred_region
          %s1645 = sand.u32 %s318, 1
          %s1646 = scalar_lea.sflag [#allocation4], %s1645
          %s1647 = sand.u32 %s318, 1
          %s1648 = smul.addr %s1647, 16
          %s1649 = scalar_lea.vmem [#allocation13], %s1648
          %1650 = dma.done %s1646, 256
        $region108: #{tpu_custom_call.1} parent=103 // pred_fallthru
          _
      $region104: #{tpu_custom_call.1} parent=5 // pred_fallthru
        _
    $region6: #{tpu_custom_call.1} parent=1 // loop_footer
      %s30 = sadd.s32 1, %s26
    $region7: #{tpu_custom_call.1} parent=1 // loop_footer_branch
      %25 = sbr.rel target = $region3
    $region8: #{tpu_custom_call.1} parent=1 // loop_exit
      _
    %1651 = vsyncpa [#allocation3], 1
    %s1652 = scalar_lea.sflag [#allocation3], 1
    %1653 = vsyncpa %s1652, 1
    %1654 = vsyncpa [#allocation6], 1
    %1655 = vsyncpa [#allocation9], 1
    %1656 = vsyncpa [#allocation12], 1
    %1657 = vsyncpa [#allocation4], 1
    %s1658 = scalar_lea.sflag [#allocation4], 1
    %1659 = vsyncpa %s1658, 1

</llo_original>
